<compile_context>
chip_gen: v7x
topology: tpu7x:2x2x1
jax: 0.10.0
libtpu: 0.0.40
codegen_flags: <defaults>
</compile_context>

<pallas_src>
import jax
import jax.numpy as jnp
from jax import lax
from jax.experimental import pallas as pl
from jax.experimental.pallas import tpu as pltpu

EPS = 1e-5
C_IN = 1008
C_OUT = 1008
C_IN_PAD = 1024    # next multiple of 128
C_OUT_PAD = 1024   # next multiple of 128
TILE_COUT = 512    # 2 parallel C_OUT tiles


def _fused_kernel(x_ref, w_ref, gamma_ref, beta_ref, o_ref):
    # x_ref:     (M, C_IN_PAD)         bf16, resident across grid steps
    # w_ref:     (TILE_COUT, C_IN_PAD) bf16, (out, in) layout (no pre-transpose)
    # gamma_ref: (1, TILE_COUT)        f32
    # beta_ref:  (1, TILE_COUT)        f32
    # o_ref:     (M, TILE_COUT)        f32

    # ReLU (VPU); stays bf16 for the MXU.
    x = jnp.maximum(x_ref[...], jnp.zeros((), dtype=x_ref.dtype))

    # 1x1 conv == channel matmul: contract x dim 1 with w dim 1 so the
    # (C_OUT, C_IN) weight is consumed directly by the MXU.
    y = lax.dot_general(
        x,
        w_ref[...],
        dimension_numbers=(((1,), (1,)), ((), ())),
        preferred_element_type=jnp.float32,
    )

    # BatchNorm2d training-mode (biased) statistics over the M pixels, in f32.
    m = y.shape[0]
    inv_m = 1.0 / m
    mean = jnp.sum(y, axis=0, keepdims=True) * inv_m
    centered = y - mean
    var = jnp.sum(centered * centered, axis=0, keepdims=True) * inv_m
    inv_std = lax.rsqrt(var + EPS)

    # Folded per-channel affine.
    scale = inv_std * gamma_ref[...]
    o_ref[...] = centered * scale + beta_ref[...]


@jax.jit
def fused_relu_conv1x1_bn(x_nchw, conv_weight, gamma, beta):
    """x_nchw: (N, 1008, H, W); conv_weight: (1008, 1008, 1, 1);
    gamma/beta: (1008,). Returns (N, 1008, H, W)."""
    n, c_in, h, w = x_nchw.shape
    assert c_in == C_IN
    m = n * h * w

    # NCHW -> (M, C_IN), zero-pad channels to 1024, cast to bf16 (fuses in XLA).
    x_mat = jnp.transpose(x_nchw, (0, 2, 3, 1)).reshape(m, c_in)
    x_mat = jnp.pad(x_mat, ((0, 0), (0, C_IN_PAD - C_IN))).astype(jnp.bfloat16)

    # (C_OUT, C_IN, 1, 1) -> (C_OUT, C_IN) kept as-is (no transpose), zero-padded.
    w_mat = conv_weight[:, :, 0, 0]
    w_mat = jnp.pad(
        w_mat, ((0, C_OUT_PAD - C_OUT), (0, C_IN_PAD - C_IN))
    ).astype(jnp.bfloat16)

    # Padded channels get gamma=0 / beta=0 (their y is 0, var=0 -> harmless,
    # and they are sliced away below).
    gamma2 = jnp.pad(gamma.astype(jnp.float32), (0, C_OUT_PAD - C_OUT))
    gamma2 = gamma2.reshape(1, C_OUT_PAD)
    beta2 = jnp.pad(beta.astype(jnp.float32), (0, C_OUT_PAD - C_OUT))
    beta2 = beta2.reshape(1, C_OUT_PAD)

    n_tiles = C_OUT_PAD // TILE_COUT

    cost = pl.CostEstimate(
        flops=2 * m * C_IN_PAD * C_OUT_PAD,
        transcendentals=C_OUT_PAD,
        bytes_accessed=(
            x_mat.size * 2 + w_mat.size * 2
            + gamma2.size * 4 + beta2.size * 4
            + m * C_OUT_PAD * 4
        ),
    )

    out_mat = pl.pallas_call(
        _fused_kernel,
        out_shape=jax.ShapeDtypeStruct((m, C_OUT_PAD), jnp.float32),
        grid_spec=pltpu.PrefetchScalarGridSpec(
            num_scalar_prefetch=0,
            grid=(n_tiles,),
            in_specs=[
                # x: constant index_map -> fetched once, resident across tiles.
                pl.BlockSpec((m, C_IN_PAD), lambda j: (0, 0)),
                # weight / gamma / beta / out tiled along C_OUT.
                pl.BlockSpec((TILE_COUT, C_IN_PAD), lambda j: (j, 0)),
                pl.BlockSpec((1, TILE_COUT), lambda j: (0, j)),
                pl.BlockSpec((1, TILE_COUT), lambda j: (0, j)),
            ],
            out_specs=pl.BlockSpec((m, TILE_COUT), lambda j: (0, j)),
        ),
        compiler_params=pltpu.CompilerParams(
            dimension_semantics=("parallel",),
            vmem_limit_bytes=32 * 1024 * 1024,
        ),
        cost_estimate=cost,
    )(x_mat, w_mat, gamma2, beta2)

    # Drop padded channels, (M, C_OUT) -> NCHW.
    out_nhwc = out_mat[:, :C_OUT].reshape(n, h, w, C_OUT)
    return jnp.transpose(out_nhwc, (0, 3, 1, 2))


def _reference(x_nchw, conv_weight, gamma, beta):
    x = jnp.maximum(x_nchw, 0.0)
    y = jnp.einsum("nchw,oc->nohw", x, conv_weight[:, :, 0, 0])
    mean = jnp.mean(y, axis=(0, 2, 3), keepdims=True)
    var = jnp.mean((y - mean) ** 2, axis=(0, 2, 3), keepdims=True)
    yhat = (y - mean) / jnp.sqrt(var + EPS)
    return yhat * gamma.reshape(1, -1, 1, 1) + beta.reshape(1, -1, 1, 1)


if __name__ == "__main__":
    key = jax.random.PRNGKey(0)
    kx, kw, kg, kb = jax.random.split(key, 4)

    # Shapes consistent with the module: channels fixed at 1008, N=1, 7x7 spatial.
    N, H, W = 1, 7, 7
    x = jax.random.normal(kx, (N, C_IN, H, W), dtype=jnp.float32)
    conv_w = jax.random.normal(kw, (C_OUT, C_IN, 1, 1), dtype=jnp.float32) * 0.02
    gamma = 1.0 + 0.1 * jax.random.normal(kg, (C_OUT,), dtype=jnp.float32)
    beta = 0.1 * jax.random.normal(kb, (C_OUT,), dtype=jnp.float32)

    out = fused_relu_conv1x1_bn(x, conv_w, gamma, beta)
    out = jax.block_until_ready(out)

    ref = jax.block_until_ready(_reference(x, conv_w, gamma, beta))
    assert out.shape == (N, C_OUT, H, W)
    assert jnp.allclose(out, ref, atol=2e-2, rtol=2e-2), "mismatch vs reference"

    # TODO(synk): BatchNorm2d running_mean/running_var (momentum=0.1) updates are
    # not produced; only the normalized forward output (training-mode stats).
    print("KERNEL_OK")
</pallas_src>

<mosaic_0001>
module attributes {stable_mosaic.version = 11 : i64} {
  func.func @_fused_kernel(%arg0: i32, %arg1: memref<49x1024xbf16, #tpu.memory_space<vmem>>, %arg2: memref<512x1024xbf16, #tpu.memory_space<vmem>>, %arg3: memref<1x512xf32, #tpu.memory_space<vmem>>, %arg4: memref<1x512xf32, #tpu.memory_space<vmem>>, %arg5: memref<49x512xf32, #tpu.memory_space<vmem>>) attributes {dimension_semantics = [#tpu.dimension_semantics<parallel>], iteration_bounds = array<i64: 2>, scalar_prefetch = 0 : i64, scratch_operands = 0 : i64, tpu.core_type = #tpu.core_type<tc>, window_params = [{pipeline_mode = #tpu.pipeline_mode<synchronous>, transform_indices = @transform_0, window_bounds = array<i64: 49, 1024>}, {transform_indices = @transform_1, window_bounds = array<i64: 512, 1024>}, {transform_indices = @transform_2, window_bounds = array<i64: 1, 512>}, {transform_indices = @transform_3, window_bounds = array<i64: 1, 512>}, {transform_indices = @transform_4, window_bounds = array<i64: 49, 512>}]} {
    %c0 = arith.constant 0 : index
    %c0_0 = arith.constant 0 : index
    %0 = vector.load %arg1[%c0, %c0_0] : memref<49x1024xbf16, #tpu.memory_space<vmem>>, vector<49x1024xbf16>
    %cst = arith.constant 0.000000e+00 : bf16
    %1 = vector.broadcast %cst : bf16 to vector<49x1024xbf16>
    %2 = arith.maximumf %0, %1 : vector<49x1024xbf16>
    %c0_1 = arith.constant 0 : index
    %c0_2 = arith.constant 0 : index
    %3 = vector.load %arg2[%c0_1, %c0_2] : memref<512x1024xbf16, #tpu.memory_space<vmem>>, vector<512x1024xbf16>
    %cst_3 = arith.constant dense<0.000000e+00> : vector<49x512xf32>
    %4 = tpu.matmul %2, %3, %cst_3 {dimension_numbers = #tpu.dot_dimension_numbers<[1], [1], [0], [0], [0, 0, 1, 0], [], []>} : vector<49x1024xbf16>, vector<512x1024xbf16>, vector<49x512xf32> -> vector<49x512xf32>
    %cst_4 = arith.constant dense<0.000000e+00> : vector<512xf32>
    %5 = vector.multi_reduction <add>, %4, %cst_4 [0] : vector<49x512xf32> to vector<512xf32>
    %6 = vector.shape_cast %5 : vector<512xf32> to vector<1x512xf32>
    %cst_5 = arith.constant 0.0204081628 : f32
    %7 = vector.broadcast %cst_5 : f32 to vector<1x512xf32>
    %8 = arith.mulf %6, %7 : vector<1x512xf32>
    %9 = vector.broadcast %8 : vector<1x512xf32> to vector<49x512xf32>
    %10 = arith.subf %4, %9 : vector<49x512xf32>
    %11 = arith.mulf %10, %10 : vector<49x512xf32>
    %cst_6 = arith.constant dense<0.000000e+00> : vector<512xf32>
    %12 = vector.multi_reduction <add>, %11, %cst_6 [0] : vector<49x512xf32> to vector<512xf32>
    %13 = vector.shape_cast %12 : vector<512xf32> to vector<1x512xf32>
    %cst_7 = arith.constant 0.0204081628 : f32
    %14 = vector.broadcast %cst_7 : f32 to vector<1x512xf32>
    %15 = arith.mulf %13, %14 : vector<1x512xf32>
    %cst_8 = arith.constant 9.99999974E-6 : f32
    %16 = vector.broadcast %cst_8 : f32 to vector<1x512xf32>
    %17 = arith.addf %15, %16 : vector<1x512xf32>
    %18 = math.rsqrt %17 : vector<1x512xf32>
    %c0_9 = arith.constant 0 : index
    %c0_10 = arith.constant 0 : index
    %19 = vector.load %arg3[%c0_9, %c0_10] : memref<1x512xf32, #tpu.memory_space<vmem>>, vector<1x512xf32>
    %20 = arith.mulf %18, %19 : vector<1x512xf32>
    %21 = vector.broadcast %20 : vector<1x512xf32> to vector<49x512xf32>
    %22 = arith.mulf %10, %21 : vector<49x512xf32>
    %c0_11 = arith.constant 0 : index
    %c0_12 = arith.constant 0 : index
    %23 = vector.load %arg4[%c0_11, %c0_12] : memref<1x512xf32, #tpu.memory_space<vmem>>, vector<1x512xf32>
    %24 = vector.broadcast %23 : vector<1x512xf32> to vector<49x512xf32>
    %25 = arith.addf %22, %24 : vector<49x512xf32>
    %c0_13 = arith.constant 0 : index
    %c0_14 = arith.constant 0 : index
    %26 = vector.load %arg5[%c0_13, %c0_14] : memref<49x512xf32, #tpu.memory_space<vmem>>, vector<49x512xf32>
    tpu.vector_store %arg5[%c0_13, %c0_14], %25 {strides = array<i32>} : memref<49x512xf32, #tpu.memory_space<vmem>>, vector<49x512xf32>,
    return
  }
  func.func @transform_0(%arg0: i32) -> (i32, i32) {
    %c0_i32 = arith.constant 0 : i32
    %c0_i32_0 = arith.constant 0 : i32
    %c0_i32_1 = arith.constant 0 : i32
    return %c0_i32, %c0_i32_0 : i32, i32
  }
  func.func @transform_1(%arg0: i32) -> (i32, i32) {
    %c0_i32 = arith.constant 0 : i32
    %c0_i32_0 = arith.constant 0 : i32
    return %arg0, %c0_i32 : i32, i32
  }
  func.func @transform_2(%arg0: i32) -> (i32, i32) {
    %c0_i32 = arith.constant 0 : i32
    %c0_i32_0 = arith.constant 0 : i32
    return %c0_i32, %arg0 : i32, i32
  }
  func.func @transform_3(%arg0: i32) -> (i32, i32) {
    %c0_i32 = arith.constant 0 : i32
    %c0_i32_0 = arith.constant 0 : i32
    return %c0_i32, %arg0 : i32, i32
  }
  func.func @transform_4(%arg0: i32) -> (i32, i32) {
    %c0_i32 = arith.constant 0 : i32
    %c0_i32_0 = arith.constant 0 : i32
    return %c0_i32, %arg0 : i32, i32
  }
}

</mosaic_0001>

<llo_original>
// kernel: fused_relu_conv1x1_bn.1
$region0: #{fused_relu_conv1x1_bn.1}
  #allocation0 [shape = 'u32[]', space=smem, size = 0x4, offset = 0x4, fixed_abs, tag = 'smem constant byte address 0x4 - core index']
  #allocation1 [shape = 'u32[144,128]{1,0:T(1,128)}', space=vmem, size = 0x12000, scoped, tag = 'internal scratch']
  %s0 = inlined_call_operand.vmem [shape: bf16[49,1024], index: 0, kind: input, shape index: {}]
  %s1 = inlined_call_operand.vmem [shape: bf16[1024,1024], index: 1, kind: input, shape index: {}]
  %s2 = inlined_call_operand.vmem [shape: f32[1,1024], index: 2, kind: input, shape index: {}]
  %s3 = inlined_call_operand.vmem [shape: f32[1,1024], index: 3, kind: input, shape index: {}]
  %s4 = inlined_call_operand.vmem [shape: f32[49,1024], index: 4, kind: output, shape index: {}]
  %s5 = sld [smem:[#allocation0]]
  $region68: #{fused_relu_conv1x1_bn.1} parent=0
    _
  %s7 = ssub.s32 1, %s5
  %s8 = scalar_select 0, %s7, %s5
  $region1: #{fused_relu_conv1x1_bn.1} parent=0
    #allocation2 [shape = 'u8[229376]{0}', space=vmem, size = 0x38000, scoped, tag = 'output window, operand 0']
    loop: start=0, step=1, limit=4
    $region2: #{fused_relu_conv1x1_bn.1} parent=1 // loop_pre_header
      _
    $region3: #{fused_relu_conv1x1_bn.1} parent=1 // loop_header
      %s10 = sphi 0, %s14
      %p11 = scmp.ge.s32.totalorder %s10, 4
      %s18 = sphi 0, %s18
      %s20 = sphi 0, %s18
      %s21 = sphi 0, %s20
      %s35 = sphi 0, %s21
      %s41 = sphi 0, %s43
      %s44 = sphi 0, %s41
      %s45 = sphi 0, %s44
      %s61 = sphi 0, %s45
      %s67 = sphi 0, %s69
      %s70 = sphi 0, %s67
      %s71 = sphi 0, %s70
      %s87 = sphi 0, %s71
      %s93 = sphi 0, %s95
      %s96 = sphi 0, %s93
      %s97 = sphi 0, %s96
      %s113 = sphi 0, %s97
      %s119 = sphi 0, %s121
      %s122 = sphi 0, %s119
      %s123 = sphi 0, %s122
      %s139 = sphi 0, %s123
    $region4: #{fused_relu_conv1x1_bn.1} parent=1 // loop_header_branch
      %13 = sbr.rel (%p11) target = $region8
    $region5: #{fused_relu_conv1x1_bn.1} parent=1 // loop_body
      %s15 = ssub.s32 %s10, 1
      %s16 = ssub.s32 %s10, 2
      %s17 = sadd.s32 %s10, 1
      %s19 = sadd.s32 %s18, 1
      %p22 = scmp.eq.s32.totalorder %s10, 1
      %p23 = scmp.ne.s32.totalorder %s18, %s20
      %p24 = scmp.eq.s32.totalorder %s10, 0
      %p25 = por %p23, %p24
      %p26 = scmp.ne.s32.totalorder %s18, %s20
      %p27 = scmp.eq.s32.totalorder %s15, 1
      %p28 = por %p26, %p27
      %p29 = scmp.ne.s32.totalorder %s20, %s21
      %p30 = scmp.eq.s32.totalorder %s15, 0
      %p31 = por %p29, %p30
      %p32 = scmp.ne.s32.totalorder %s20, %s21
      %p33 = scmp.eq.s32.totalorder %s16, 1
      %p34 = por %p32, %p33
      %p36 = scmp.ne.s32.totalorder %s21, %s35
      %p37 = scmp.eq.s32.totalorder %s16, 0
      %p38 = por %p36, %p37
      %s39 = ssub.s32 %s10, %s17
      %p40 = scmp.eq.s32.totalorder %s39, 0
      %s42 = sadd.s32 %s41, 1
      %s43 = scalar_select %p40, %s41, %s42
      %p46 = pneg %p40
      %p47 = scmp.eq.s32.totalorder %s10, 1
      %p48 = por %p46, %p47
      %p49 = scmp.ne.s32.totalorder %s41, %s44
      %p50 = scmp.eq.s32.totalorder %s10, 0
      %p51 = por %p49, %p50
      %p52 = scmp.ne.s32.totalorder %s41, %s44
      %p53 = scmp.eq.s32.totalorder %s15, 1
      %p54 = por %p52, %p53
      %p55 = scmp.ne.s32.totalorder %s44, %s45
      %p56 = scmp.eq.s32.totalorder %s15, 0
      %p57 = por %p55, %p56
      %p58 = scmp.ne.s32.totalorder %s44, %s45
      %p59 = scmp.eq.s32.totalorder %s16, 1
      %p60 = por %p58, %p59
      %p62 = scmp.ne.s32.totalorder %s45, %s61
      %p63 = scmp.eq.s32.totalorder %s16, 0
      %p64 = por %p62, %p63
      %s65 = ssub.s32 %s10, %s17
      %p66 = scmp.eq.s32.totalorder %s65, 0
      %s68 = sadd.s32 %s67, 1
      %s69 = scalar_select %p66, %s67, %s68
      %p72 = pneg %p66
      %p73 = scmp.eq.s32.totalorder %s10, 1
      %p74 = por %p72, %p73
      %p75 = scmp.ne.s32.totalorder %s67, %s70
      %p76 = scmp.eq.s32.totalorder %s10, 0
      %p77 = por %p75, %p76
      %p78 = scmp.ne.s32.totalorder %s67, %s70
      %p79 = scmp.eq.s32.totalorder %s15, 1
      %p80 = por %p78, %p79
      %p81 = scmp.ne.s32.totalorder %s70, %s71
      %p82 = scmp.eq.s32.totalorder %s15, 0
      %p83 = por %p81, %p82
      %p84 = scmp.ne.s32.totalorder %s70, %s71
      %p85 = scmp.eq.s32.totalorder %s16, 1
      %p86 = por %p84, %p85
      %p88 = scmp.ne.s32.totalorder %s71, %s87
      %p89 = scmp.eq.s32.totalorder %s16, 0
      %p90 = por %p88, %p89
      %s91 = ssub.s32 %s10, %s17
      %p92 = scmp.eq.s32.totalorder %s91, 0
      %s94 = sadd.s32 %s93, 1
      %s95 = scalar_select %p92, %s93, %s94
      %p98 = pneg %p92
      %p99 = scmp.eq.s32.totalorder %s10, 1
      %p100 = por %p98, %p99
      %p101 = scmp.ne.s32.totalorder %s93, %s96
      %p102 = scmp.eq.s32.totalorder %s10, 0
      %p103 = por %p101, %p102
      %p104 = scmp.ne.s32.totalorder %s93, %s96
      %p105 = scmp.eq.s32.totalorder %s15, 1
      %p106 = por %p104, %p105
      %p107 = scmp.ne.s32.totalorder %s96, %s97
      %p108 = scmp.eq.s32.totalorder %s15, 0
      %p109 = por %p107, %p108
      %p110 = scmp.ne.s32.totalorder %s96, %s97
      %p111 = scmp.eq.s32.totalorder %s16, 1
      %p112 = por %p110, %p111
      %p114 = scmp.ne.s32.totalorder %s97, %s113
      %p115 = scmp.eq.s32.totalorder %s16, 0
      %p116 = por %p114, %p115
      %s117 = ssub.s32 %s10, %s17
      %p118 = scmp.eq.s32.totalorder %s117, 0
      %s120 = sadd.s32 %s119, 1
      %s121 = scalar_select %p118, %s119, %s120
      %p124 = pneg %p118
      %p125 = scmp.eq.s32.totalorder %s10, 1
      %p126 = por %p124, %p125
      %p127 = scmp.ne.s32.totalorder %s119, %s122
      %p128 = scmp.eq.s32.totalorder %s10, 0
      %p129 = por %p127, %p128
      %p130 = scmp.ne.s32.totalorder %s119, %s122
      %p131 = scmp.eq.s32.totalorder %s15, 1
      %p132 = por %p130, %p131
      %p133 = scmp.ne.s32.totalorder %s122, %s123
      %p134 = scmp.eq.s32.totalorder %s15, 0
      %p135 = por %p133, %p134
      %p136 = scmp.ne.s32.totalorder %s122, %s123
      %p137 = scmp.eq.s32.totalorder %s16, 1
      %p138 = por %p136, %p137
      %p140 = scmp.ne.s32.totalorder %s123, %s139
      %p141 = scmp.eq.s32.totalorder %s16, 0
      %p142 = por %p140, %p141
      %p143 = scmp.le.s32.totalorder 1, %s10
      %p144 = scmp.lt.s32.totalorder %s10, 3
      %p145 = pnand %p143, %p144
      %p146 = pneg %p145
      // Predicated region
      $region9: #{fused_relu_conv1x1_bn.1} parent=5 // pred_check
        _
      $region10: #{fused_relu_conv1x1_bn.1} parent=5 // pred_check_branch
        %148 = sbr.rel (%p145) target = $region12
      $region11: #{fused_relu_conv1x1_bn.1} parent=5 // pred_region
        %s149 = ssub.s32 %s10, 1
        // Predicated region
        $region13: #{fused_relu_conv1x1_bn.1} parent=11 // pred_check
          %p150 = pneg %p31
        $region14: #{fused_relu_conv1x1_bn.1} parent=11 // pred_check_branch
          %152 = sbr.rel (%p150) target = $region16
        $region15: #{fused_relu_conv1x1_bn.1} parent=11 // pred_region
          _
        $region16: #{fused_relu_conv1x1_bn.1} parent=11 // pred_fallthru
          _
      $region12: #{fused_relu_conv1x1_bn.1} parent=5 // pred_fallthru
        _
      %p153 = scmp.lt.s32.totalorder %s10, 2
      // Predicated region
      $region17: #{fused_relu_conv1x1_bn.1} parent=5 // pred_check
        %p154 = pneg %p153
      $region18: #{fused_relu_conv1x1_bn.1} parent=5 // pred_check_branch
        %156 = sbr.rel (%p154) target = $region20
      $region19: #{fused_relu_conv1x1_bn.1} parent=5 // pred_region
        // Predicated region
        $region21: #{fused_relu_conv1x1_bn.1} parent=19 // pred_check
          %p157 = pneg %p51
        $region22: #{fused_relu_conv1x1_bn.1} parent=19 // pred_check_branch
          %159 = sbr.rel (%p157) target = $region24
        $region23: #{fused_relu_conv1x1_bn.1} parent=19 // pred_region
          %s160 = smul.u32 64, %s10
          %p161 = scmp.lt.s32.totalorder %s160, 127
          %s162 = scalar_select %p161, %s160, 127
          %s163 = smul.addr %s162, 8
          %s164 = smul.addr %s163, 4
          %s165 = scalar_lea.vmem %s1, %s164
          %s166 = smul.u32 64, %s10
        $region24: #{fused_relu_conv1x1_bn.1} parent=19 // pred_fallthru
          _
        // Predicated region
        $region25: #{fused_relu_conv1x1_bn.1} parent=19 // pred_check
          %p167 = pneg %p77
        $region26: #{fused_relu_conv1x1_bn.1} parent=19 // pred_check_branch
          %169 = sbr.rel (%p167) target = $region28
        $region27: #{fused_relu_conv1x1_bn.1} parent=19 // pred_region
          %s170 = smul.u32 4, %s10
          %p171 = scmp.lt.s32.totalorder %s170, 7
          %s172 = scalar_select %p171, %s170, 7
          %s173 = scalar_lea.vmem %s2, %s172
          %s174 = smul.u32 4, %s10
        $region28: #{fused_relu_conv1x1_bn.1} parent=19 // pred_fallthru
          _
        // Predicated region
        $region29: #{fused_relu_conv1x1_bn.1} parent=19 // pred_check
          %p175 = pneg %p103
        $region30: #{fused_relu_conv1x1_bn.1} parent=19 // pred_check_branch
          %177 = sbr.rel (%p175) target = $region32
        $region31: #{fused_relu_conv1x1_bn.1} parent=19 // pred_region
          %s178 = smul.u32 4, %s10
          %p179 = scmp.lt.s32.totalorder %s178, 7
          %s180 = scalar_select %p179, %s178, 7
          %s181 = scalar_lea.vmem %s3, %s180
          %s182 = smul.u32 4, %s10
        $region32: #{fused_relu_conv1x1_bn.1} parent=19 // pred_fallthru
          _
      $region20: #{fused_relu_conv1x1_bn.1} parent=5 // pred_fallthru
        _
      %p183 = scmp.le.s32.totalorder 1, %s10
      %p184 = scmp.lt.s32.totalorder %s10, 3
      %p185 = pnand %p183, %p184
      %p186 = pneg %p185
      // Predicated region
      $region33: #{fused_relu_conv1x1_bn.1} parent=5 // pred_check
        _
      $region34: #{fused_relu_conv1x1_bn.1} parent=5 // pred_check_branch
        %188 = sbr.rel (%p185) target = $region36
      $region35: #{fused_relu_conv1x1_bn.1} parent=5 // pred_region
        %s189 = ssub.s32 %s10, 1
        %p190 = pneg %p31
        %p191 = pneg %p28
        %s192 = smul.u32 64, %s15
        %p193 = scmp.lt.s32.totalorder %s192, 127
        %s194 = scalar_select %p193, %s192, 127
        %s195 = smul.addr %s194, 8
        %s196 = smul.addr %s195, 4
        %s197 = scalar_lea.vmem %s1, %s196
        %p198 = pneg %p57
        %p199 = pneg %p54
        %s200 = smul.u32 4, %s15
        %p201 = scmp.lt.s32.totalorder %s200, 7
        %s202 = scalar_select %p201, %s200, 7
        %s203 = scalar_lea.vmem %s2, %s202
        %p204 = pneg %p83
        %p205 = pneg %p80
        %s206 = smul.u32 4, %s15
        %p207 = scmp.lt.s32.totalorder %s206, 7
        %s208 = scalar_select %p207, %s206, 7
        %s209 = scalar_lea.vmem %s3, %s208
        %p210 = pneg %p109
        %p211 = pneg %p106
        %p212 = pneg %p135
        %p213 = pneg %p132
        %s214 = sand.u32 %s122, 1
        %s215 = sand.u32 %s122, 1
        %s216 = smul.addr %s215, 224
        %s217 = scalar_lea.vmem [#allocation2], %s216
        %s218 = smul.u32 64, %s15
        %p219 = scmp.lt.s32.totalorder %s218, 127
        %s220 = scalar_select %p219, %s218, 127
        %s221 = smul.addr %s220, 8
        %s222 = smul.addr %s221, 4
        %s223 = scalar_lea.vmem %s1, %s222
        %s224 = smul.u32 64, %s15
        %s225 = smul.u32 4, %s15
        %p226 = scmp.lt.s32.totalorder %s225, 7
        %s227 = scalar_select %p226, %s225, 7
        %s228 = scalar_lea.vmem %s2, %s227
        %s229 = smul.u32 4, %s15
        %s230 = smul.u32 4, %s15
        %p231 = scmp.lt.s32.totalorder %s230, 7
        %s232 = scalar_select %p231, %s230, 7
        %s233 = scalar_lea.vmem %s3, %s232
        %s234 = smul.u32 4, %s15
        %s235 = smul.u32 4, %s15
        %v237 = vld [vmem:[%s0] sm:$0xff]
        %v238 = vld [vmem:[%s0 + $0x8] sm:$0xff]
        %v239 = vld [vmem:[%s0 + $0x10] sm:$0xff]
        %v240 = vld [vmem:[%s0 + $0x18] sm:$0xff]
        %v241 = vld [vmem:[%s0 + $0x20] sm:$0xff]
        %v242 = vld [vmem:[%s0 + $0x28] sm:$0xff]
        %v243 = vld [vmem:[%s0 + $0x30] sm:$0xff]
        %v244 = vld [vmem:[%s0 + $0x38] sm:$0xff]
        %v245 = vld [vmem:[%s0 + $0x40] sm:$0xff]
        %v246 = vld [vmem:[%s0 + $0x48] sm:$0xff]
        %v247 = vld [vmem:[%s0 + $0x50] sm:$0xff]
        %v248 = vld [vmem:[%s0 + $0x58] sm:$0xff]
        %v249 = vld [vmem:[%s0 + $0x60] sm:$0xff]
        %v250 = vld [vmem:[%s0 + $0x68] sm:$0xff]
        %v251 = vld [vmem:[%s0 + $0x70] sm:$0xff]
        %v252 = vld [vmem:[%s0 + $0x78] sm:$0xff]
        %v253 = vld [vmem:[%s0 + $0x80] sm:$0xff]
        %v254 = vld [vmem:[%s0 + $0x88] sm:$0xff]
        %v255 = vld [vmem:[%s0 + $0x90] sm:$0xff]
        %v256 = vld [vmem:[%s0 + $0x98] sm:$0xff]
        %v257 = vld [vmem:[%s0 + $0xa0] sm:$0xff]
        %v258 = vld [vmem:[%s0 + $0xa8] sm:$0xff]
        %v259 = vld [vmem:[%s0 + $0xb0] sm:$0xff]
        %v260 = vld [vmem:[%s0 + $0xb8] sm:$0xff]
        %v261 = vld [vmem:[%s0 + $0xc0] sm:$0x11]
        %v262 = vld [vmem:[%s0 + $0xc8] sm:$0x11]
        %v263 = vld [vmem:[%s0 + $0xd0] sm:$0x11]
        %v264 = vld [vmem:[%s0 + $0xd8] sm:$0x11]
        %v265 = vmax.bf16 %v237, 0
        %v266 = vmax.bf16 %v238, 0
        %v267 = vmax.bf16 %v239, 0
        %v268 = vmax.bf16 %v240, 0
        %v269 = vmax.bf16 %v241, 0
        %v270 = vmax.bf16 %v242, 0
        %v271 = vmax.bf16 %v243, 0
        %v272 = vmax.bf16 %v244, 0
        %v273 = vmax.bf16 %v245, 0
        %v274 = vmax.bf16 %v246, 0
        %v275 = vmax.bf16 %v247, 0
        %v276 = vmax.bf16 %v248, 0
        %v277 = vmax.bf16 %v249, 0
        %v278 = vmax.bf16 %v250, 0
        %v279 = vmax.bf16 %v251, 0
        %v280 = vmax.bf16 %v252, 0
        %v281 = vmax.bf16 %v253, 0
        %v282 = vmax.bf16 %v254, 0
        %v283 = vmax.bf16 %v255, 0
        %v284 = vmax.bf16 %v256, 0
        %v285 = vmax.bf16 %v257, 0
        %v286 = vmax.bf16 %v258, 0
        %v287 = vmax.bf16 %v259, 0
        %v288 = vmax.bf16 %v260, 0
        %v289 = vmax.bf16 %v261, 0
        %v290 = vmax.bf16 %v262, 0
        %v291 = vmax.bf16 %v263, 0
        %v292 = vmax.bf16 %v264, 0
        %v293 = vld [vmem:[%s223] sm:$0xff]
        %v294 = vld [vmem:[%s223 + $0x8] sm:$0xff]
        %v295 = vld [vmem:[%s223 + $0x10] sm:$0xff]
        %v296 = vld [vmem:[%s223 + $0x18] sm:$0xff]
        %v297 = vld [vmem:[%s223 + $0x20] sm:$0xff]
        %v298 = vld [vmem:[%s223 + $0x28] sm:$0xff]
        %v299 = vld [vmem:[%s223 + $0x30] sm:$0xff]
        %v300 = vld [vmem:[%s223 + $0x38] sm:$0xff]
        %v301 = vld [vmem:[%s223 + $0x40] sm:$0xff]
        %v302 = vld [vmem:[%s223 + $0x48] sm:$0xff]
        %v303 = vld [vmem:[%s223 + $0x50] sm:$0xff]
        %v304 = vld [vmem:[%s223 + $0x58] sm:$0xff]
        %v305 = vld [vmem:[%s223 + $0x60] sm:$0xff]
        %v306 = vld [vmem:[%s223 + $0x68] sm:$0xff]
        %v307 = vld [vmem:[%s223 + $0x70] sm:$0xff]
        %v308 = vld [vmem:[%s223 + $0x78] sm:$0xff]
        %v309 = vld [vmem:[%s223 + $0x80] sm:$0xff]
        %v310 = vld [vmem:[%s223 + $0x88] sm:$0xff]
        %v311 = vld [vmem:[%s223 + $0x90] sm:$0xff]
        %v312 = vld [vmem:[%s223 + $0x98] sm:$0xff]
        %v313 = vld [vmem:[%s223 + $0xa0] sm:$0xff]
        %v314 = vld [vmem:[%s223 + $0xa8] sm:$0xff]
        %v315 = vld [vmem:[%s223 + $0xb0] sm:$0xff]
        %v316 = vld [vmem:[%s223 + $0xb8] sm:$0xff]
        %v317 = vld [vmem:[%s223 + $0xc0] sm:$0xff]
        %v318 = vld [vmem:[%s223 + $0xc8] sm:$0xff]
        %v319 = vld [vmem:[%s223 + $0xd0] sm:$0xff]
        %v320 = vld [vmem:[%s223 + $0xd8] sm:$0xff]
        %v321 = vld [vmem:[%s223 + $0xe0] sm:$0xff]
        %v322 = vld [vmem:[%s223 + $0xe8] sm:$0xff]
        %v323 = vld [vmem:[%s223 + $0xf0] sm:$0xff]
        %v324 = vld [vmem:[%s223 + $0xf8] sm:$0xff]
        %v325 = vld [vmem:[%s223 + $0x100] sm:$0xff]
        %v326 = vld [vmem:[%s223 + $0x108] sm:$0xff]
        %v327 = vld [vmem:[%s223 + $0x110] sm:$0xff]
        %v328 = vld [vmem:[%s223 + $0x118] sm:$0xff]
        %v329 = vld [vmem:[%s223 + $0x120] sm:$0xff]
        %v330 = vld [vmem:[%s223 + $0x128] sm:$0xff]
        %v331 = vld [vmem:[%s223 + $0x130] sm:$0xff]
        %v332 = vld [vmem:[%s223 + $0x138] sm:$0xff]
        %v333 = vld [vmem:[%s223 + $0x140] sm:$0xff]
        %v334 = vld [vmem:[%s223 + $0x148] sm:$0xff]
        %v335 = vld [vmem:[%s223 + $0x150] sm:$0xff]
        %v336 = vld [vmem:[%s223 + $0x158] sm:$0xff]
        %v337 = vld [vmem:[%s223 + $0x160] sm:$0xff]
        %v338 = vld [vmem:[%s223 + $0x168] sm:$0xff]
        %v339 = vld [vmem:[%s223 + $0x170] sm:$0xff]
        %v340 = vld [vmem:[%s223 + $0x178] sm:$0xff]
        %v341 = vld [vmem:[%s223 + $0x180] sm:$0xff]
        %v342 = vld [vmem:[%s223 + $0x188] sm:$0xff]
        %v343 = vld [vmem:[%s223 + $0x190] sm:$0xff]
        %v344 = vld [vmem:[%s223 + $0x198] sm:$0xff]
        %v345 = vld [vmem:[%s223 + $0x1a0] sm:$0xff]
        %v346 = vld [vmem:[%s223 + $0x1a8] sm:$0xff]
        %v347 = vld [vmem:[%s223 + $0x1b0] sm:$0xff]
        %v348 = vld [vmem:[%s223 + $0x1b8] sm:$0xff]
        %v349 = vld [vmem:[%s223 + $0x1c0] sm:$0xff]
        %v350 = vld [vmem:[%s223 + $0x1c8] sm:$0xff]
        %v351 = vld [vmem:[%s223 + $0x1d0] sm:$0xff]
        %v352 = vld [vmem:[%s223 + $0x1d8] sm:$0xff]
        %v353 = vld [vmem:[%s223 + $0x1e0] sm:$0xff]
        %v354 = vld [vmem:[%s223 + $0x1e8] sm:$0xff]
        %v355 = vld [vmem:[%s223 + $0x1f0] sm:$0xff]
        %v356 = vld [vmem:[%s223 + $0x1f8] sm:$0xff]
        %v357 = vld [vmem:[%s223 + $0x200] sm:$0xff]
        %v358 = vld [vmem:[%s223 + $0x208] sm:$0xff]
        %v359 = vld [vmem:[%s223 + $0x210] sm:$0xff]
        %v360 = vld [vmem:[%s223 + $0x218] sm:$0xff]
        %v361 = vld [vmem:[%s223 + $0x220] sm:$0xff]
        %v362 = vld [vmem:[%s223 + $0x228] sm:$0xff]
        %v363 = vld [vmem:[%s223 + $0x230] sm:$0xff]
        %v364 = vld [vmem:[%s223 + $0x238] sm:$0xff]
        %v365 = vld [vmem:[%s223 + $0x240] sm:$0xff]
        %v366 = vld [vmem:[%s223 + $0x248] sm:$0xff]
        %v367 = vld [vmem:[%s223 + $0x250] sm:$0xff]
        %v368 = vld [vmem:[%s223 + $0x258] sm:$0xff]
        %v369 = vld [vmem:[%s223 + $0x260] sm:$0xff]
        %v370 = vld [vmem:[%s223 + $0x268] sm:$0xff]
        %v371 = vld [vmem:[%s223 + $0x270] sm:$0xff]
        %v372 = vld [vmem:[%s223 + $0x278] sm:$0xff]
        %v373 = vld [vmem:[%s223 + $0x280] sm:$0xff]
        %v374 = vld [vmem:[%s223 + $0x288] sm:$0xff]
        %v375 = vld [vmem:[%s223 + $0x290] sm:$0xff]
        %v376 = vld [vmem:[%s223 + $0x298] sm:$0xff]
        %v377 = vld [vmem:[%s223 + $0x2a0] sm:$0xff]
        %v378 = vld [vmem:[%s223 + $0x2a8] sm:$0xff]
        %v379 = vld [vmem:[%s223 + $0x2b0] sm:$0xff]
        %v380 = vld [vmem:[%s223 + $0x2b8] sm:$0xff]
        %v381 = vld [vmem:[%s223 + $0x2c0] sm:$0xff]
        %v382 = vld [vmem:[%s223 + $0x2c8] sm:$0xff]
        %v383 = vld [vmem:[%s223 + $0x2d0] sm:$0xff]
        %v384 = vld [vmem:[%s223 + $0x2d8] sm:$0xff]
        %v385 = vld [vmem:[%s223 + $0x2e0] sm:$0xff]
        %v386 = vld [vmem:[%s223 + $0x2e8] sm:$0xff]
        %v387 = vld [vmem:[%s223 + $0x2f0] sm:$0xff]
        %v388 = vld [vmem:[%s223 + $0x2f8] sm:$0xff]
        %v389 = vld [vmem:[%s223 + $0x300] sm:$0xff]
        %v390 = vld [vmem:[%s223 + $0x308] sm:$0xff]
        %v391 = vld [vmem:[%s223 + $0x310] sm:$0xff]
        %v392 = vld [vmem:[%s223 + $0x318] sm:$0xff]
        %v393 = vld [vmem:[%s223 + $0x320] sm:$0xff]
        %v394 = vld [vmem:[%s223 + $0x328] sm:$0xff]
        %v395 = vld [vmem:[%s223 + $0x330] sm:$0xff]
        %v396 = vld [vmem:[%s223 + $0x338] sm:$0xff]
        %v397 = vld [vmem:[%s223 + $0x340] sm:$0xff]
        %v398 = vld [vmem:[%s223 + $0x348] sm:$0xff]
        %v399 = vld [vmem:[%s223 + $0x350] sm:$0xff]
        %v400 = vld [vmem:[%s223 + $0x358] sm:$0xff]
        %v401 = vld [vmem:[%s223 + $0x360] sm:$0xff]
        %v402 = vld [vmem:[%s223 + $0x368] sm:$0xff]
        %v403 = vld [vmem:[%s223 + $0x370] sm:$0xff]
        %v404 = vld [vmem:[%s223 + $0x378] sm:$0xff]
        %v405 = vld [vmem:[%s223 + $0x380] sm:$0xff]
        %v406 = vld [vmem:[%s223 + $0x388] sm:$0xff]
        %v407 = vld [vmem:[%s223 + $0x390] sm:$0xff]
        %v408 = vld [vmem:[%s223 + $0x398] sm:$0xff]
        %v409 = vld [vmem:[%s223 + $0x3a0] sm:$0xff]
        %v410 = vld [vmem:[%s223 + $0x3a8] sm:$0xff]
        %v411 = vld [vmem:[%s223 + $0x3b0] sm:$0xff]
        %v412 = vld [vmem:[%s223 + $0x3b8] sm:$0xff]
        %v413 = vld [vmem:[%s223 + $0x3c0] sm:$0xff]
        %v414 = vld [vmem:[%s223 + $0x3c8] sm:$0xff]
        %v415 = vld [vmem:[%s223 + $0x3d0] sm:$0xff]
        %v416 = vld [vmem:[%s223 + $0x3d8] sm:$0xff]
        %v417 = vld [vmem:[%s223 + $0x3e0] sm:$0xff]
        %v418 = vld [vmem:[%s223 + $0x3e8] sm:$0xff]
        %v419 = vld [vmem:[%s223 + $0x3f0] sm:$0xff]
        %v420 = vld [vmem:[%s223 + $0x3f8] sm:$0xff]
        %v421 = vld [vmem:[%s223 + $0x400] sm:$0xff]
        %v422 = vld [vmem:[%s223 + $0x408] sm:$0xff]
        %v423 = vld [vmem:[%s223 + $0x410] sm:$0xff]
        %v424 = vld [vmem:[%s223 + $0x418] sm:$0xff]
        %v425 = vld [vmem:[%s223 + $0x420] sm:$0xff]
        %v426 = vld [vmem:[%s223 + $0x428] sm:$0xff]
        %v427 = vld [vmem:[%s223 + $0x430] sm:$0xff]
        %v428 = vld [vmem:[%s223 + $0x438] sm:$0xff]
        %v429 = vld [vmem:[%s223 + $0x440] sm:$0xff]
        %v430 = vld [vmem:[%s223 + $0x448] sm:$0xff]
        %v431 = vld [vmem:[%s223 + $0x450] sm:$0xff]
        %v432 = vld [vmem:[%s223 + $0x458] sm:$0xff]
        %v433 = vld [vmem:[%s223 + $0x460] sm:$0xff]
        %v434 = vld [vmem:[%s223 + $0x468] sm:$0xff]
        %v435 = vld [vmem:[%s223 + $0x470] sm:$0xff]
        %v436 = vld [vmem:[%s223 + $0x478] sm:$0xff]
        %v437 = vld [vmem:[%s223 + $0x480] sm:$0xff]
        %v438 = vld [vmem:[%s223 + $0x488] sm:$0xff]
        %v439 = vld [vmem:[%s223 + $0x490] sm:$0xff]
        %v440 = vld [vmem:[%s223 + $0x498] sm:$0xff]
        %v441 = vld [vmem:[%s223 + $0x4a0] sm:$0xff]
        %v442 = vld [vmem:[%s223 + $0x4a8] sm:$0xff]
        %v443 = vld [vmem:[%s223 + $0x4b0] sm:$0xff]
        %v444 = vld [vmem:[%s223 + $0x4b8] sm:$0xff]
        %v445 = vld [vmem:[%s223 + $0x4c0] sm:$0xff]
        %v446 = vld [vmem:[%s223 + $0x4c8] sm:$0xff]
        %v447 = vld [vmem:[%s223 + $0x4d0] sm:$0xff]
        %v448 = vld [vmem:[%s223 + $0x4d8] sm:$0xff]
        %v449 = vld [vmem:[%s223 + $0x4e0] sm:$0xff]
        %v450 = vld [vmem:[%s223 + $0x4e8] sm:$0xff]
        %v451 = vld [vmem:[%s223 + $0x4f0] sm:$0xff]
        %v452 = vld [vmem:[%s223 + $0x4f8] sm:$0xff]
        %v453 = vld [vmem:[%s223 + $0x500] sm:$0xff]
        %v454 = vld [vmem:[%s223 + $0x508] sm:$0xff]
        %v455 = vld [vmem:[%s223 + $0x510] sm:$0xff]
        %v456 = vld [vmem:[%s223 + $0x518] sm:$0xff]
        %v457 = vld [vmem:[%s223 + $0x520] sm:$0xff]
        %v458 = vld [vmem:[%s223 + $0x528] sm:$0xff]
        %v459 = vld [vmem:[%s223 + $0x530] sm:$0xff]
        %v460 = vld [vmem:[%s223 + $0x538] sm:$0xff]
        %v461 = vld [vmem:[%s223 + $0x540] sm:$0xff]
        %v462 = vld [vmem:[%s223 + $0x548] sm:$0xff]
        %v463 = vld [vmem:[%s223 + $0x550] sm:$0xff]
        %v464 = vld [vmem:[%s223 + $0x558] sm:$0xff]
        %v465 = vld [vmem:[%s223 + $0x560] sm:$0xff]
        %v466 = vld [vmem:[%s223 + $0x568] sm:$0xff]
        %v467 = vld [vmem:[%s223 + $0x570] sm:$0xff]
        %v468 = vld [vmem:[%s223 + $0x578] sm:$0xff]
        %v469 = vld [vmem:[%s223 + $0x580] sm:$0xff]
        %v470 = vld [vmem:[%s223 + $0x588] sm:$0xff]
        %v471 = vld [vmem:[%s223 + $0x590] sm:$0xff]
        %v472 = vld [vmem:[%s223 + $0x598] sm:$0xff]
        %v473 = vld [vmem:[%s223 + $0x5a0] sm:$0xff]
        %v474 = vld [vmem:[%s223 + $0x5a8] sm:$0xff]
        %v475 = vld [vmem:[%s223 + $0x5b0] sm:$0xff]
        %v476 = vld [vmem:[%s223 + $0x5b8] sm:$0xff]
        %v477 = vld [vmem:[%s223 + $0x5c0] sm:$0xff]
        %v478 = vld [vmem:[%s223 + $0x5c8] sm:$0xff]
        %v479 = vld [vmem:[%s223 + $0x5d0] sm:$0xff]
        %v480 = vld [vmem:[%s223 + $0x5d8] sm:$0xff]
        %v481 = vld [vmem:[%s223 + $0x5e0] sm:$0xff]
        %v482 = vld [vmem:[%s223 + $0x5e8] sm:$0xff]
        %v483 = vld [vmem:[%s223 + $0x5f0] sm:$0xff]
        %v484 = vld [vmem:[%s223 + $0x5f8] sm:$0xff]
        %v485 = vld [vmem:[%s223 + $0x600] sm:$0xff]
        %v486 = vld [vmem:[%s223 + $0x608] sm:$0xff]
        %v487 = vld [vmem:[%s223 + $0x610] sm:$0xff]
        %v488 = vld [vmem:[%s223 + $0x618] sm:$0xff]
        %v489 = vld [vmem:[%s223 + $0x620] sm:$0xff]
        %v490 = vld [vmem:[%s223 + $0x628] sm:$0xff]
        %v491 = vld [vmem:[%s223 + $0x630] sm:$0xff]
        %v492 = vld [vmem:[%s223 + $0x638] sm:$0xff]
        %v493 = vld [vmem:[%s223 + $0x640] sm:$0xff]
        %v494 = vld [vmem:[%s223 + $0x648] sm:$0xff]
        %v495 = vld [vmem:[%s223 + $0x650] sm:$0xff]
        %v496 = vld [vmem:[%s223 + $0x658] sm:$0xff]
        %v497 = vld [vmem:[%s223 + $0x660] sm:$0xff]
        %v498 = vld [vmem:[%s223 + $0x668] sm:$0xff]
        %v499 = vld [vmem:[%s223 + $0x670] sm:$0xff]
        %v500 = vld [vmem:[%s223 + $0x678] sm:$0xff]
        %v501 = vld [vmem:[%s223 + $0x680] sm:$0xff]
        %v502 = vld [vmem:[%s223 + $0x688] sm:$0xff]
        %v503 = vld [vmem:[%s223 + $0x690] sm:$0xff]
        %v504 = vld [vmem:[%s223 + $0x698] sm:$0xff]
        %v505 = vld [vmem:[%s223 + $0x6a0] sm:$0xff]
        %v506 = vld [vmem:[%s223 + $0x6a8] sm:$0xff]
        %v507 = vld [vmem:[%s223 + $0x6b0] sm:$0xff]
        %v508 = vld [vmem:[%s223 + $0x6b8] sm:$0xff]
        %v509 = vld [vmem:[%s223 + $0x6c0] sm:$0xff]
        %v510 = vld [vmem:[%s223 + $0x6c8] sm:$0xff]
        %v511 = vld [vmem:[%s223 + $0x6d0] sm:$0xff]
        %v512 = vld [vmem:[%s223 + $0x6d8] sm:$0xff]
        %v513 = vld [vmem:[%s223 + $0x6e0] sm:$0xff]
        %v514 = vld [vmem:[%s223 + $0x6e8] sm:$0xff]
        %v515 = vld [vmem:[%s223 + $0x6f0] sm:$0xff]
        %v516 = vld [vmem:[%s223 + $0x6f8] sm:$0xff]
        %v517 = vld [vmem:[%s223 + $0x700] sm:$0xff]
        %v518 = vld [vmem:[%s223 + $0x708] sm:$0xff]
        %v519 = vld [vmem:[%s223 + $0x710] sm:$0xff]
        %v520 = vld [vmem:[%s223 + $0x718] sm:$0xff]
        %v521 = vld [vmem:[%s223 + $0x720] sm:$0xff]
        %v522 = vld [vmem:[%s223 + $0x728] sm:$0xff]
        %v523 = vld [vmem:[%s223 + $0x730] sm:$0xff]
        %v524 = vld [vmem:[%s223 + $0x738] sm:$0xff]
        %v525 = vld [vmem:[%s223 + $0x740] sm:$0xff]
        %v526 = vld [vmem:[%s223 + $0x748] sm:$0xff]
        %v527 = vld [vmem:[%s223 + $0x750] sm:$0xff]
        %v528 = vld [vmem:[%s223 + $0x758] sm:$0xff]
        %v529 = vld [vmem:[%s223 + $0x760] sm:$0xff]
        %v530 = vld [vmem:[%s223 + $0x768] sm:$0xff]
        %v531 = vld [vmem:[%s223 + $0x770] sm:$0xff]
        %v532 = vld [vmem:[%s223 + $0x778] sm:$0xff]
        %v533 = vld [vmem:[%s223 + $0x780] sm:$0xff]
        %v534 = vld [vmem:[%s223 + $0x788] sm:$0xff]
        %v535 = vld [vmem:[%s223 + $0x790] sm:$0xff]
        %v536 = vld [vmem:[%s223 + $0x798] sm:$0xff]
        %v537 = vld [vmem:[%s223 + $0x7a0] sm:$0xff]
        %v538 = vld [vmem:[%s223 + $0x7a8] sm:$0xff]
        %v539 = vld [vmem:[%s223 + $0x7b0] sm:$0xff]
        %v540 = vld [vmem:[%s223 + $0x7b8] sm:$0xff]
        %v541 = vld [vmem:[%s223 + $0x7c0] sm:$0xff]
        %v542 = vld [vmem:[%s223 + $0x7c8] sm:$0xff]
        %v543 = vld [vmem:[%s223 + $0x7d0] sm:$0xff]
        %v544 = vld [vmem:[%s223 + $0x7d8] sm:$0xff]
        %v545 = vld [vmem:[%s223 + $0x7e0] sm:$0xff]
        %v546 = vld [vmem:[%s223 + $0x7e8] sm:$0xff]
        %v547 = vld [vmem:[%s223 + $0x7f0] sm:$0xff]
        %v548 = vld [vmem:[%s223 + $0x7f8] sm:$0xff]
        %v577 = vunpack.c.l.b16 %v265
        %v578 = vunpack.c.h.b16 %v265
        %v579 = vunpack.c.l.b16 %v266
        %v580 = vunpack.c.h.b16 %v266
        %v581 = vunpack.c.l.b16 %v267
        %v582 = vunpack.c.h.b16 %v267
        %v583 = vunpack.c.l.b16 %v268
        %v584 = vunpack.c.h.b16 %v268
        %v585 = vunpack.c.l.b16 %v269
        %v586 = vunpack.c.h.b16 %v269
        %v587 = vunpack.c.l.b16 %v270
        %v588 = vunpack.c.h.b16 %v270
        %v589 = vunpack.c.l.b16 %v271
        %v590 = vunpack.c.h.b16 %v271
        %v591 = vunpack.c.l.b16 %v272
        %v592 = vunpack.c.h.b16 %v272
        %v593 = vunpack.c.l.b16 %v273
        %v594 = vunpack.c.h.b16 %v273
        %v595 = vunpack.c.l.b16 %v274
        %v596 = vunpack.c.h.b16 %v274
        %v597 = vunpack.c.l.b16 %v275
        %v598 = vunpack.c.h.b16 %v275
        %v599 = vunpack.c.l.b16 %v276
        %v600 = vunpack.c.h.b16 %v276
        %v601 = vunpack.c.l.b16 %v277
        %v602 = vunpack.c.h.b16 %v277
        %v603 = vunpack.c.l.b16 %v278
        %v604 = vunpack.c.h.b16 %v278
        %v605 = vunpack.c.l.b16 %v279
        %v606 = vunpack.c.h.b16 %v279
        %v607 = vunpack.c.l.b16 %v280
        %v608 = vunpack.c.h.b16 %v280
        %v609 = vunpack.c.l.b16 %v281
        %v610 = vunpack.c.h.b16 %v281
        %v611 = vunpack.c.l.b16 %v282
        %v612 = vunpack.c.h.b16 %v282
        %v613 = vunpack.c.l.b16 %v283
        %v614 = vunpack.c.h.b16 %v283
        %v615 = vunpack.c.l.b16 %v284
        %v616 = vunpack.c.h.b16 %v284
        %v617 = vunpack.c.l.b16 %v285
        %v618 = vunpack.c.h.b16 %v285
        %v619 = vunpack.c.l.b16 %v286
        %v620 = vunpack.c.h.b16 %v286
        %v621 = vunpack.c.l.b16 %v287
        %v622 = vunpack.c.h.b16 %v287
        %v623 = vunpack.c.l.b16 %v288
        %v624 = vunpack.c.h.b16 %v288
        %v625 = vunpack.c.l.b16 %v289
        %v626 = vunpack.c.h.b16 %v289
        %v627 = vunpack.c.l.b16 %v290
        %v628 = vunpack.c.h.b16 %v290
        %v629 = vunpack.c.l.b16 %v291
        %v630 = vunpack.c.h.b16 %v291
        %v631 = vunpack.c.l.b16 %v292
        %v632 = vunpack.c.h.b16 %v292
        %v633 = vpack.c.b16 %v585, %v577
        %v634 = vpack.c.b16 %v586, %v578
        %v635 = vpack.c.b16 %v587, %v579
        %v636 = vpack.c.b16 %v588, %v580
        %v637 = vpack.c.b16 %v589, %v581
        %v638 = vpack.c.b16 %v590, %v582
        %v639 = vpack.c.b16 %v591, %v583
        %v640 = vpack.c.b16 %v592, %v584
        %v641 = vpack.c.b16 %v601, %v593
        %v642 = vpack.c.b16 %v602, %v594
        %v643 = vpack.c.b16 %v603, %v595
        %v644 = vpack.c.b16 %v604, %v596
        %v645 = vpack.c.b16 %v605, %v597
        %v646 = vpack.c.b16 %v606, %v598
        %v647 = vpack.c.b16 %v607, %v599
        %v648 = vpack.c.b16 %v608, %v600
        %v649 = vpack.c.b16 %v617, %v609
        %v650 = vpack.c.b16 %v618, %v610
        %v651 = vpack.c.b16 %v619, %v611
        %v652 = vpack.c.b16 %v620, %v612
        %v653 = vpack.c.b16 %v621, %v613
        %v654 = vpack.c.b16 %v622, %v614
        %v655 = vpack.c.b16 %v623, %v615
        %v656 = vpack.c.b16 %v624, %v616
        %v657 = vpack.c.b16 %v625, %v625
        %v658 = vpack.c.b16 %v626, %v626
        %v659 = vpack.c.b16 %v627, %v627
        %v660 = vpack.c.b16 %v628, %v628
        %v661 = vpack.c.b16 %v629, %v629
        %v662 = vpack.c.b16 %v630, %v630
        %v663 = vpack.c.b16 %v631, %v631
        %v664 = vpack.c.b16 %v632, %v632
        %v953 = vunpack.c.l.b16 %v293
        %v954 = vunpack.c.h.b16 %v293
        %v955 = vunpack.c.l.b16 %v294
        %v956 = vunpack.c.h.b16 %v294
        %v957 = vunpack.c.l.b16 %v295
        %v958 = vunpack.c.h.b16 %v295
        %v959 = vunpack.c.l.b16 %v296
        %v960 = vunpack.c.h.b16 %v296
        %v961 = vunpack.c.l.b16 %v297
        %v962 = vunpack.c.h.b16 %v297
        %v963 = vunpack.c.l.b16 %v298
        %v964 = vunpack.c.h.b16 %v298
        %v965 = vunpack.c.l.b16 %v299
        %v966 = vunpack.c.h.b16 %v299
        %v967 = vunpack.c.l.b16 %v300
        %v968 = vunpack.c.h.b16 %v300
        %v969 = vunpack.c.l.b16 %v301
        %v970 = vunpack.c.h.b16 %v301
        %v971 = vunpack.c.l.b16 %v302
        %v972 = vunpack.c.h.b16 %v302
        %v973 = vunpack.c.l.b16 %v303
        %v974 = vunpack.c.h.b16 %v303
        %v975 = vunpack.c.l.b16 %v304
        %v976 = vunpack.c.h.b16 %v304
        %v977 = vunpack.c.l.b16 %v305
        %v978 = vunpack.c.h.b16 %v305
        %v979 = vunpack.c.l.b16 %v306
        %v980 = vunpack.c.h.b16 %v306
        %v981 = vunpack.c.l.b16 %v307
        %v982 = vunpack.c.h.b16 %v307
        %v983 = vunpack.c.l.b16 %v308
        %v984 = vunpack.c.h.b16 %v308
        %v985 = vunpack.c.l.b16 %v309
        %v986 = vunpack.c.h.b16 %v309
        %v987 = vunpack.c.l.b16 %v310
        %v988 = vunpack.c.h.b16 %v310
        %v989 = vunpack.c.l.b16 %v311
        %v990 = vunpack.c.h.b16 %v311
        %v991 = vunpack.c.l.b16 %v312
        %v992 = vunpack.c.h.b16 %v312
        %v993 = vunpack.c.l.b16 %v313
        %v994 = vunpack.c.h.b16 %v313
        %v995 = vunpack.c.l.b16 %v314
        %v996 = vunpack.c.h.b16 %v314
        %v997 = vunpack.c.l.b16 %v315
        %v998 = vunpack.c.h.b16 %v315
        %v999 = vunpack.c.l.b16 %v316
        %v1000 = vunpack.c.h.b16 %v316
        %v1001 = vunpack.c.l.b16 %v317
        %v1002 = vunpack.c.h.b16 %v317
        %v1003 = vunpack.c.l.b16 %v318
        %v1004 = vunpack.c.h.b16 %v318
        %v1005 = vunpack.c.l.b16 %v319
        %v1006 = vunpack.c.h.b16 %v319
        %v1007 = vunpack.c.l.b16 %v320
        %v1008 = vunpack.c.h.b16 %v320
        %v1009 = vunpack.c.l.b16 %v321
        %v1010 = vunpack.c.h.b16 %v321
        %v1011 = vunpack.c.l.b16 %v322
        %v1012 = vunpack.c.h.b16 %v322
        %v1013 = vunpack.c.l.b16 %v323
        %v1014 = vunpack.c.h.b16 %v323
        %v1015 = vunpack.c.l.b16 %v324
        %v1016 = vunpack.c.h.b16 %v324
        %v1017 = vunpack.c.l.b16 %v325
        %v1018 = vunpack.c.h.b16 %v325
        %v1019 = vunpack.c.l.b16 %v326
        %v1020 = vunpack.c.h.b16 %v326
        %v1021 = vunpack.c.l.b16 %v327
        %v1022 = vunpack.c.h.b16 %v327
        %v1023 = vunpack.c.l.b16 %v328
        %v1024 = vunpack.c.h.b16 %v328
        %v1025 = vunpack.c.l.b16 %v329
        %v1026 = vunpack.c.h.b16 %v329
        %v1027 = vunpack.c.l.b16 %v330
        %v1028 = vunpack.c.h.b16 %v330
        %v1029 = vunpack.c.l.b16 %v331
        %v1030 = vunpack.c.h.b16 %v331
        %v1031 = vunpack.c.l.b16 %v332
        %v1032 = vunpack.c.h.b16 %v332
        %v1033 = vunpack.c.l.b16 %v333
        %v1034 = vunpack.c.h.b16 %v333
        %v1035 = vunpack.c.l.b16 %v334
        %v1036 = vunpack.c.h.b16 %v334
        %v1037 = vunpack.c.l.b16 %v335
        %v1038 = vunpack.c.h.b16 %v335
        %v1039 = vunpack.c.l.b16 %v336
        %v1040 = vunpack.c.h.b16 %v336
        %v1041 = vunpack.c.l.b16 %v337
        %v1042 = vunpack.c.h.b16 %v337
        %v1043 = vunpack.c.l.b16 %v338
        %v1044 = vunpack.c.h.b16 %v338
        %v1045 = vunpack.c.l.b16 %v339
        %v1046 = vunpack.c.h.b16 %v339
        %v1047 = vunpack.c.l.b16 %v340
        %v1048 = vunpack.c.h.b16 %v340
        %v1049 = vunpack.c.l.b16 %v341
        %v1050 = vunpack.c.h.b16 %v341
        %v1051 = vunpack.c.l.b16 %v342
        %v1052 = vunpack.c.h.b16 %v342
        %v1053 = vunpack.c.l.b16 %v343
        %v1054 = vunpack.c.h.b16 %v343
        %v1055 = vunpack.c.l.b16 %v344
        %v1056 = vunpack.c.h.b16 %v344
        %v1057 = vunpack.c.l.b16 %v345
        %v1058 = vunpack.c.h.b16 %v345
        %v1059 = vunpack.c.l.b16 %v346
        %v1060 = vunpack.c.h.b16 %v346
        %v1061 = vunpack.c.l.b16 %v347
        %v1062 = vunpack.c.h.b16 %v347
        %v1063 = vunpack.c.l.b16 %v348
        %v1064 = vunpack.c.h.b16 %v348
        %v1065 = vunpack.c.l.b16 %v349
        %v1066 = vunpack.c.h.b16 %v349
        %v1067 = vunpack.c.l.b16 %v350
        %v1068 = vunpack.c.h.b16 %v350
        %v1069 = vunpack.c.l.b16 %v351
        %v1070 = vunpack.c.h.b16 %v351
        %v1071 = vunpack.c.l.b16 %v352
        %v1072 = vunpack.c.h.b16 %v352
        %v1073 = vunpack.c.l.b16 %v353
        %v1074 = vunpack.c.h.b16 %v353
        %v1075 = vunpack.c.l.b16 %v354
        %v1076 = vunpack.c.h.b16 %v354
        %v1077 = vunpack.c.l.b16 %v355
        %v1078 = vunpack.c.h.b16 %v355
        %v1079 = vunpack.c.l.b16 %v356
        %v1080 = vunpack.c.h.b16 %v356
        %v1081 = vunpack.c.l.b16 %v357
        %v1082 = vunpack.c.h.b16 %v357
        %v1083 = vunpack.c.l.b16 %v358
        %v1084 = vunpack.c.h.b16 %v358
        %v1085 = vunpack.c.l.b16 %v359
        %v1086 = vunpack.c.h.b16 %v359
        %v1087 = vunpack.c.l.b16 %v360
        %v1088 = vunpack.c.h.b16 %v360
        %v1089 = vunpack.c.l.b16 %v361
        %v1090 = vunpack.c.h.b16 %v361
        %v1091 = vunpack.c.l.b16 %v362
        %v1092 = vunpack.c.h.b16 %v362
        %v1093 = vunpack.c.l.b16 %v363
        %v1094 = vunpack.c.h.b16 %v363
        %v1095 = vunpack.c.l.b16 %v364
        %v1096 = vunpack.c.h.b16 %v364
        %v1097 = vunpack.c.l.b16 %v365
        %v1098 = vunpack.c.h.b16 %v365
        %v1099 = vunpack.c.l.b16 %v366
        %v1100 = vunpack.c.h.b16 %v366
        %v1101 = vunpack.c.l.b16 %v367
        %v1102 = vunpack.c.h.b16 %v367
        %v1103 = vunpack.c.l.b16 %v368
        %v1104 = vunpack.c.h.b16 %v368
        %v1105 = vunpack.c.l.b16 %v369
        %v1106 = vunpack.c.h.b16 %v369
        %v1107 = vunpack.c.l.b16 %v370
        %v1108 = vunpack.c.h.b16 %v370
        %v1109 = vunpack.c.l.b16 %v371
        %v1110 = vunpack.c.h.b16 %v371
        %v1111 = vunpack.c.l.b16 %v372
        %v1112 = vunpack.c.h.b16 %v372
        %v1113 = vunpack.c.l.b16 %v373
        %v1114 = vunpack.c.h.b16 %v373
        %v1115 = vunpack.c.l.b16 %v374
        %v1116 = vunpack.c.h.b16 %v374
        %v1117 = vunpack.c.l.b16 %v375
        %v1118 = vunpack.c.h.b16 %v375
        %v1119 = vunpack.c.l.b16 %v376
        %v1120 = vunpack.c.h.b16 %v376
        %v1121 = vunpack.c.l.b16 %v377
        %v1122 = vunpack.c.h.b16 %v377
        %v1123 = vunpack.c.l.b16 %v378
        %v1124 = vunpack.c.h.b16 %v378
        %v1125 = vunpack.c.l.b16 %v379
        %v1126 = vunpack.c.h.b16 %v379
        %v1127 = vunpack.c.l.b16 %v380
        %v1128 = vunpack.c.h.b16 %v380
        %v1129 = vunpack.c.l.b16 %v381
        %v1130 = vunpack.c.h.b16 %v381
        %v1131 = vunpack.c.l.b16 %v382
        %v1132 = vunpack.c.h.b16 %v382
        %v1133 = vunpack.c.l.b16 %v383
        %v1134 = vunpack.c.h.b16 %v383
        %v1135 = vunpack.c.l.b16 %v384
        %v1136 = vunpack.c.h.b16 %v384
        %v1137 = vunpack.c.l.b16 %v385
        %v1138 = vunpack.c.h.b16 %v385
        %v1139 = vunpack.c.l.b16 %v386
        %v1140 = vunpack.c.h.b16 %v386
        %v1141 = vunpack.c.l.b16 %v387
        %v1142 = vunpack.c.h.b16 %v387
        %v1143 = vunpack.c.l.b16 %v388
        %v1144 = vunpack.c.h.b16 %v388
        %v1145 = vunpack.c.l.b16 %v389
        %v1146 = vunpack.c.h.b16 %v389
        %v1147 = vunpack.c.l.b16 %v390
        %v1148 = vunpack.c.h.b16 %v390
        %v1149 = vunpack.c.l.b16 %v391
        %v1150 = vunpack.c.h.b16 %v391
        %v1151 = vunpack.c.l.b16 %v392
        %v1152 = vunpack.c.h.b16 %v392
        %v1153 = vunpack.c.l.b16 %v393
        %v1154 = vunpack.c.h.b16 %v393
        %v1155 = vunpack.c.l.b16 %v394
        %v1156 = vunpack.c.h.b16 %v394
        %v1157 = vunpack.c.l.b16 %v395
        %v1158 = vunpack.c.h.b16 %v395
        %v1159 = vunpack.c.l.b16 %v396
        %v1160 = vunpack.c.h.b16 %v396
        %v1161 = vunpack.c.l.b16 %v397
        %v1162 = vunpack.c.h.b16 %v397
        %v1163 = vunpack.c.l.b16 %v398
        %v1164 = vunpack.c.h.b16 %v398
        %v1165 = vunpack.c.l.b16 %v399
        %v1166 = vunpack.c.h.b16 %v399
        %v1167 = vunpack.c.l.b16 %v400
        %v1168 = vunpack.c.h.b16 %v400
        %v1169 = vunpack.c.l.b16 %v401
        %v1170 = vunpack.c.h.b16 %v401
        %v1171 = vunpack.c.l.b16 %v402
        %v1172 = vunpack.c.h.b16 %v402
        %v1173 = vunpack.c.l.b16 %v403
        %v1174 = vunpack.c.h.b16 %v403
        %v1175 = vunpack.c.l.b16 %v404
        %v1176 = vunpack.c.h.b16 %v404
        %v1177 = vunpack.c.l.b16 %v405
        %v1178 = vunpack.c.h.b16 %v405
        %v1179 = vunpack.c.l.b16 %v406
        %v1180 = vunpack.c.h.b16 %v406
        %v1181 = vunpack.c.l.b16 %v407
        %v1182 = vunpack.c.h.b16 %v407
        %v1183 = vunpack.c.l.b16 %v408
        %v1184 = vunpack.c.h.b16 %v408
        %v1185 = vunpack.c.l.b16 %v409
        %v1186 = vunpack.c.h.b16 %v409
        %v1187 = vunpack.c.l.b16 %v410
        %v1188 = vunpack.c.h.b16 %v410
        %v1189 = vunpack.c.l.b16 %v411
        %v1190 = vunpack.c.h.b16 %v411
        %v1191 = vunpack.c.l.b16 %v412
        %v1192 = vunpack.c.h.b16 %v412
        %v1193 = vunpack.c.l.b16 %v413
        %v1194 = vunpack.c.h.b16 %v413
        %v1195 = vunpack.c.l.b16 %v414
        %v1196 = vunpack.c.h.b16 %v414
        %v1197 = vunpack.c.l.b16 %v415
        %v1198 = vunpack.c.h.b16 %v415
        %v1199 = vunpack.c.l.b16 %v416
        %v1200 = vunpack.c.h.b16 %v416
        %v1201 = vunpack.c.l.b16 %v417
        %v1202 = vunpack.c.h.b16 %v417
        %v1203 = vunpack.c.l.b16 %v418
        %v1204 = vunpack.c.h.b16 %v418
        %v1205 = vunpack.c.l.b16 %v419
        %v1206 = vunpack.c.h.b16 %v419
        %v1207 = vunpack.c.l.b16 %v420
        %v1208 = vunpack.c.h.b16 %v420
        %v1209 = vunpack.c.l.b16 %v421
        %v1210 = vunpack.c.h.b16 %v421
        %v1211 = vunpack.c.l.b16 %v422
        %v1212 = vunpack.c.h.b16 %v422
        %v1213 = vunpack.c.l.b16 %v423
        %v1214 = vunpack.c.h.b16 %v423
        %v1215 = vunpack.c.l.b16 %v424
        %v1216 = vunpack.c.h.b16 %v424
        %v1217 = vunpack.c.l.b16 %v425
        %v1218 = vunpack.c.h.b16 %v425
        %v1219 = vunpack.c.l.b16 %v426
        %v1220 = vunpack.c.h.b16 %v426
        %v1221 = vunpack.c.l.b16 %v427
        %v1222 = vunpack.c.h.b16 %v427
        %v1223 = vunpack.c.l.b16 %v428
        %v1224 = vunpack.c.h.b16 %v428
        %v1225 = vunpack.c.l.b16 %v429
        %v1226 = vunpack.c.h.b16 %v429
        %v1227 = vunpack.c.l.b16 %v430
        %v1228 = vunpack.c.h.b16 %v430
        %v1229 = vunpack.c.l.b16 %v431
        %v1230 = vunpack.c.h.b16 %v431
        %v1231 = vunpack.c.l.b16 %v432
        %v1232 = vunpack.c.h.b16 %v432
        %v1233 = vunpack.c.l.b16 %v433
        %v1234 = vunpack.c.h.b16 %v433
        %v1235 = vunpack.c.l.b16 %v434
        %v1236 = vunpack.c.h.b16 %v434
        %v1237 = vunpack.c.l.b16 %v435
        %v1238 = vunpack.c.h.b16 %v435
        %v1239 = vunpack.c.l.b16 %v436
        %v1240 = vunpack.c.h.b16 %v436
        %v1241 = vunpack.c.l.b16 %v437
        %v1242 = vunpack.c.h.b16 %v437
        %v1243 = vunpack.c.l.b16 %v438
        %v1244 = vunpack.c.h.b16 %v438
        %v1245 = vunpack.c.l.b16 %v439
        %v1246 = vunpack.c.h.b16 %v439
        %v1247 = vunpack.c.l.b16 %v440
        %v1248 = vunpack.c.h.b16 %v440
        %v1249 = vunpack.c.l.b16 %v441
        %v1250 = vunpack.c.h.b16 %v441
        %v1251 = vunpack.c.l.b16 %v442
        %v1252 = vunpack.c.h.b16 %v442
        %v1253 = vunpack.c.l.b16 %v443
        %v1254 = vunpack.c.h.b16 %v443
        %v1255 = vunpack.c.l.b16 %v444
        %v1256 = vunpack.c.h.b16 %v444
        %v1257 = vunpack.c.l.b16 %v445
        %v1258 = vunpack.c.h.b16 %v445
        %v1259 = vunpack.c.l.b16 %v446
        %v1260 = vunpack.c.h.b16 %v446
        %v1261 = vunpack.c.l.b16 %v447
        %v1262 = vunpack.c.h.b16 %v447
        %v1263 = vunpack.c.l.b16 %v448
        %v1264 = vunpack.c.h.b16 %v448
        %v1265 = vunpack.c.l.b16 %v449
        %v1266 = vunpack.c.h.b16 %v449
        %v1267 = vunpack.c.l.b16 %v450
        %v1268 = vunpack.c.h.b16 %v450
        %v1269 = vunpack.c.l.b16 %v451
        %v1270 = vunpack.c.h.b16 %v451
        %v1271 = vunpack.c.l.b16 %v452
        %v1272 = vunpack.c.h.b16 %v452
        %v1273 = vunpack.c.l.b16 %v453
        %v1274 = vunpack.c.h.b16 %v453
        %v1275 = vunpack.c.l.b16 %v454
        %v1276 = vunpack.c.h.b16 %v454
        %v1277 = vunpack.c.l.b16 %v455
        %v1278 = vunpack.c.h.b16 %v455
        %v1279 = vunpack.c.l.b16 %v456
        %v1280 = vunpack.c.h.b16 %v456
        %v1281 = vunpack.c.l.b16 %v457
        %v1282 = vunpack.c.h.b16 %v457
        %v1283 = vunpack.c.l.b16 %v458
        %v1284 = vunpack.c.h.b16 %v458
        %v1285 = vunpack.c.l.b16 %v459
        %v1286 = vunpack.c.h.b16 %v459
        %v1287 = vunpack.c.l.b16 %v460
        %v1288 = vunpack.c.h.b16 %v460
        %v1289 = vunpack.c.l.b16 %v461
        %v1290 = vunpack.c.h.b16 %v461
        %v1291 = vunpack.c.l.b16 %v462
        %v1292 = vunpack.c.h.b16 %v462
        %v1293 = vunpack.c.l.b16 %v463
        %v1294 = vunpack.c.h.b16 %v463
        %v1295 = vunpack.c.l.b16 %v464
        %v1296 = vunpack.c.h.b16 %v464
        %v1297 = vunpack.c.l.b16 %v465
        %v1298 = vunpack.c.h.b16 %v465
        %v1299 = vunpack.c.l.b16 %v466
        %v1300 = vunpack.c.h.b16 %v466
        %v1301 = vunpack.c.l.b16 %v467
        %v1302 = vunpack.c.h.b16 %v467
        %v1303 = vunpack.c.l.b16 %v468
        %v1304 = vunpack.c.h.b16 %v468
        %v1305 = vunpack.c.l.b16 %v469
        %v1306 = vunpack.c.h.b16 %v469
        %v1307 = vunpack.c.l.b16 %v470
        %v1308 = vunpack.c.h.b16 %v470
        %v1309 = vunpack.c.l.b16 %v471
        %v1310 = vunpack.c.h.b16 %v471
        %v1311 = vunpack.c.l.b16 %v472
        %v1312 = vunpack.c.h.b16 %v472
        %v1313 = vunpack.c.l.b16 %v473
        %v1314 = vunpack.c.h.b16 %v473
        %v1315 = vunpack.c.l.b16 %v474
        %v1316 = vunpack.c.h.b16 %v474
        %v1317 = vunpack.c.l.b16 %v475
        %v1318 = vunpack.c.h.b16 %v475
        %v1319 = vunpack.c.l.b16 %v476
        %v1320 = vunpack.c.h.b16 %v476
        %v1321 = vunpack.c.l.b16 %v477
        %v1322 = vunpack.c.h.b16 %v477
        %v1323 = vunpack.c.l.b16 %v478
        %v1324 = vunpack.c.h.b16 %v478
        %v1325 = vunpack.c.l.b16 %v479
        %v1326 = vunpack.c.h.b16 %v479
        %v1327 = vunpack.c.l.b16 %v480
        %v1328 = vunpack.c.h.b16 %v480
        %v1329 = vunpack.c.l.b16 %v481
        %v1330 = vunpack.c.h.b16 %v481
        %v1331 = vunpack.c.l.b16 %v482
        %v1332 = vunpack.c.h.b16 %v482
        %v1333 = vunpack.c.l.b16 %v483
        %v1334 = vunpack.c.h.b16 %v483
        %v1335 = vunpack.c.l.b16 %v484
        %v1336 = vunpack.c.h.b16 %v484
        %v1337 = vunpack.c.l.b16 %v485
        %v1338 = vunpack.c.h.b16 %v485
        %v1339 = vunpack.c.l.b16 %v486
        %v1340 = vunpack.c.h.b16 %v486
        %v1341 = vunpack.c.l.b16 %v487
        %v1342 = vunpack.c.h.b16 %v487
        %v1343 = vunpack.c.l.b16 %v488
        %v1344 = vunpack.c.h.b16 %v488
        %v1345 = vunpack.c.l.b16 %v489
        %v1346 = vunpack.c.h.b16 %v489
        %v1347 = vunpack.c.l.b16 %v490
        %v1348 = vunpack.c.h.b16 %v490
        %v1349 = vunpack.c.l.b16 %v491
        %v1350 = vunpack.c.h.b16 %v491
        %v1351 = vunpack.c.l.b16 %v492
        %v1352 = vunpack.c.h.b16 %v492
        %v1353 = vunpack.c.l.b16 %v493
        %v1354 = vunpack.c.h.b16 %v493
        %v1355 = vunpack.c.l.b16 %v494
        %v1356 = vunpack.c.h.b16 %v494
        %v1357 = vunpack.c.l.b16 %v495
        %v1358 = vunpack.c.h.b16 %v495
        %v1359 = vunpack.c.l.b16 %v496
        %v1360 = vunpack.c.h.b16 %v496
        %v1361 = vunpack.c.l.b16 %v497
        %v1362 = vunpack.c.h.b16 %v497
        %v1363 = vunpack.c.l.b16 %v498
        %v1364 = vunpack.c.h.b16 %v498
        %v1365 = vunpack.c.l.b16 %v499
        %v1366 = vunpack.c.h.b16 %v499
        %v1367 = vunpack.c.l.b16 %v500
        %v1368 = vunpack.c.h.b16 %v500
        %v1369 = vunpack.c.l.b16 %v501
        %v1370 = vunpack.c.h.b16 %v501
        %v1371 = vunpack.c.l.b16 %v502
        %v1372 = vunpack.c.h.b16 %v502
        %v1373 = vunpack.c.l.b16 %v503
        %v1374 = vunpack.c.h.b16 %v503
        %v1375 = vunpack.c.l.b16 %v504
        %v1376 = vunpack.c.h.b16 %v504
        %v1377 = vunpack.c.l.b16 %v505
        %v1378 = vunpack.c.h.b16 %v505
        %v1379 = vunpack.c.l.b16 %v506
        %v1380 = vunpack.c.h.b16 %v506
        %v1381 = vunpack.c.l.b16 %v507
        %v1382 = vunpack.c.h.b16 %v507
        %v1383 = vunpack.c.l.b16 %v508
        %v1384 = vunpack.c.h.b16 %v508
        %v1385 = vunpack.c.l.b16 %v509
        %v1386 = vunpack.c.h.b16 %v509
        %v1387 = vunpack.c.l.b16 %v510
        %v1388 = vunpack.c.h.b16 %v510
        %v1389 = vunpack.c.l.b16 %v511
        %v1390 = vunpack.c.h.b16 %v511
        %v1391 = vunpack.c.l.b16 %v512
        %v1392 = vunpack.c.h.b16 %v512
        %v1393 = vunpack.c.l.b16 %v513
        %v1394 = vunpack.c.h.b16 %v513
        %v1395 = vunpack.c.l.b16 %v514
        %v1396 = vunpack.c.h.b16 %v514
        %v1397 = vunpack.c.l.b16 %v515
        %v1398 = vunpack.c.h.b16 %v515
        %v1399 = vunpack.c.l.b16 %v516
        %v1400 = vunpack.c.h.b16 %v516
        %v1401 = vunpack.c.l.b16 %v517
        %v1402 = vunpack.c.h.b16 %v517
        %v1403 = vunpack.c.l.b16 %v518
        %v1404 = vunpack.c.h.b16 %v518
        %v1405 = vunpack.c.l.b16 %v519
        %v1406 = vunpack.c.h.b16 %v519
        %v1407 = vunpack.c.l.b16 %v520
        %v1408 = vunpack.c.h.b16 %v520
        %v1409 = vunpack.c.l.b16 %v521
        %v1410 = vunpack.c.h.b16 %v521
        %v1411 = vunpack.c.l.b16 %v522
        %v1412 = vunpack.c.h.b16 %v522
        %v1413 = vunpack.c.l.b16 %v523
        %v1414 = vunpack.c.h.b16 %v523
        %v1415 = vunpack.c.l.b16 %v524
        %v1416 = vunpack.c.h.b16 %v524
        %v1417 = vunpack.c.l.b16 %v525
        %v1418 = vunpack.c.h.b16 %v525
        %v1419 = vunpack.c.l.b16 %v526
        %v1420 = vunpack.c.h.b16 %v526
        %v1421 = vunpack.c.l.b16 %v527
        %v1422 = vunpack.c.h.b16 %v527
        %v1423 = vunpack.c.l.b16 %v528
        %v1424 = vunpack.c.h.b16 %v528
        %v1425 = vunpack.c.l.b16 %v529
        %v1426 = vunpack.c.h.b16 %v529
        %v1427 = vunpack.c.l.b16 %v530
        %v1428 = vunpack.c.h.b16 %v530
        %v1429 = vunpack.c.l.b16 %v531
        %v1430 = vunpack.c.h.b16 %v531
        %v1431 = vunpack.c.l.b16 %v532
        %v1432 = vunpack.c.h.b16 %v532
        %v1433 = vunpack.c.l.b16 %v533
        %v1434 = vunpack.c.h.b16 %v533
        %v1435 = vunpack.c.l.b16 %v534
        %v1436 = vunpack.c.h.b16 %v534
        %v1437 = vunpack.c.l.b16 %v535
        %v1438 = vunpack.c.h.b16 %v535
        %v1439 = vunpack.c.l.b16 %v536
        %v1440 = vunpack.c.h.b16 %v536
        %v1441 = vunpack.c.l.b16 %v537
        %v1442 = vunpack.c.h.b16 %v537
        %v1443 = vunpack.c.l.b16 %v538
        %v1444 = vunpack.c.h.b16 %v538
        %v1445 = vunpack.c.l.b16 %v539
        %v1446 = vunpack.c.h.b16 %v539
        %v1447 = vunpack.c.l.b16 %v540
        %v1448 = vunpack.c.h.b16 %v540
        %v1449 = vunpack.c.l.b16 %v541
        %v1450 = vunpack.c.h.b16 %v541
        %v1451 = vunpack.c.l.b16 %v542
        %v1452 = vunpack.c.h.b16 %v542
        %v1453 = vunpack.c.l.b16 %v543
        %v1454 = vunpack.c.h.b16 %v543
        %v1455 = vunpack.c.l.b16 %v544
        %v1456 = vunpack.c.h.b16 %v544
        %v1457 = vunpack.c.l.b16 %v545
        %v1458 = vunpack.c.h.b16 %v545
        %v1459 = vunpack.c.l.b16 %v546
        %v1460 = vunpack.c.h.b16 %v546
        %v1461 = vunpack.c.l.b16 %v547
        %v1462 = vunpack.c.h.b16 %v547
        %v1463 = vunpack.c.l.b16 %v548
        %v1464 = vunpack.c.h.b16 %v548
        %v1465 = vpack.c.b16 %v961, %v953
        %v1466 = vpack.c.b16 %v962, %v954
        %v1467 = vpack.c.b16 %v963, %v955
        %v1468 = vpack.c.b16 %v964, %v956
        %v1469 = vpack.c.b16 %v965, %v957
        %v1470 = vpack.c.b16 %v966, %v958
        %v1471 = vpack.c.b16 %v967, %v959
        %v1472 = vpack.c.b16 %v968, %v960
        %v1473 = vpack.c.b16 %v977, %v969
        %v1474 = vpack.c.b16 %v978, %v970
        %v1475 = vpack.c.b16 %v979, %v971
        %v1476 = vpack.c.b16 %v980, %v972
        %v1477 = vpack.c.b16 %v981, %v973
        %v1478 = vpack.c.b16 %v982, %v974
        %v1479 = vpack.c.b16 %v983, %v975
        %v1480 = vpack.c.b16 %v984, %v976
        %v1481 = vpack.c.b16 %v993, %v985
        %v1482 = vpack.c.b16 %v994, %v986
        %v1483 = vpack.c.b16 %v995, %v987
        %v1484 = vpack.c.b16 %v996, %v988
        %v1485 = vpack.c.b16 %v997, %v989
        %v1486 = vpack.c.b16 %v998, %v990
        %v1487 = vpack.c.b16 %v999, %v991
        %v1488 = vpack.c.b16 %v1000, %v992
        %v1489 = vpack.c.b16 %v1009, %v1001
        %v1490 = vpack.c.b16 %v1010, %v1002
        %v1491 = vpack.c.b16 %v1011, %v1003
        %v1492 = vpack.c.b16 %v1012, %v1004
        %v1493 = vpack.c.b16 %v1013, %v1005
        %v1494 = vpack.c.b16 %v1014, %v1006
        %v1495 = vpack.c.b16 %v1015, %v1007
        %v1496 = vpack.c.b16 %v1016, %v1008
        %v1497 = vpack.c.b16 %v1025, %v1017
        %v1498 = vpack.c.b16 %v1026, %v1018
        %v1499 = vpack.c.b16 %v1027, %v1019
        %v1500 = vpack.c.b16 %v1028, %v1020
        %v1501 = vpack.c.b16 %v1029, %v1021
        %v1502 = vpack.c.b16 %v1030, %v1022
        %v1503 = vpack.c.b16 %v1031, %v1023
        %v1504 = vpack.c.b16 %v1032, %v1024
        %v1505 = vpack.c.b16 %v1041, %v1033
        %v1506 = vpack.c.b16 %v1042, %v1034
        %v1507 = vpack.c.b16 %v1043, %v1035
        %v1508 = vpack.c.b16 %v1044, %v1036
        %v1509 = vpack.c.b16 %v1045, %v1037
        %v1510 = vpack.c.b16 %v1046, %v1038
        %v1511 = vpack.c.b16 %v1047, %v1039
        %v1512 = vpack.c.b16 %v1048, %v1040
        %v1513 = vpack.c.b16 %v1057, %v1049
        %v1514 = vpack.c.b16 %v1058, %v1050
        %v1515 = vpack.c.b16 %v1059, %v1051
        %v1516 = vpack.c.b16 %v1060, %v1052
        %v1517 = vpack.c.b16 %v1061, %v1053
        %v1518 = vpack.c.b16 %v1062, %v1054
        %v1519 = vpack.c.b16 %v1063, %v1055
        %v1520 = vpack.c.b16 %v1064, %v1056
        %v1521 = vpack.c.b16 %v1073, %v1065
        %v1522 = vpack.c.b16 %v1074, %v1066
        %v1523 = vpack.c.b16 %v1075, %v1067
        %v1524 = vpack.c.b16 %v1076, %v1068
        %v1525 = vpack.c.b16 %v1077, %v1069
        %v1526 = vpack.c.b16 %v1078, %v1070
        %v1527 = vpack.c.b16 %v1079, %v1071
        %v1528 = vpack.c.b16 %v1080, %v1072
        %v1529 = vpack.c.b16 %v1089, %v1081
        %v1530 = vpack.c.b16 %v1090, %v1082
        %v1531 = vpack.c.b16 %v1091, %v1083
        %v1532 = vpack.c.b16 %v1092, %v1084
        %v1533 = vpack.c.b16 %v1093, %v1085
        %v1534 = vpack.c.b16 %v1094, %v1086
        %v1535 = vpack.c.b16 %v1095, %v1087
        %v1536 = vpack.c.b16 %v1096, %v1088
        %v1537 = vpack.c.b16 %v1105, %v1097
        %v1538 = vpack.c.b16 %v1106, %v1098
        %v1539 = vpack.c.b16 %v1107, %v1099
        %v1540 = vpack.c.b16 %v1108, %v1100
        %v1541 = vpack.c.b16 %v1109, %v1101
        %v1542 = vpack.c.b16 %v1110, %v1102
        %v1543 = vpack.c.b16 %v1111, %v1103
        %v1544 = vpack.c.b16 %v1112, %v1104
        %v1545 = vpack.c.b16 %v1121, %v1113
        %v1546 = vpack.c.b16 %v1122, %v1114
        %v1547 = vpack.c.b16 %v1123, %v1115
        %v1548 = vpack.c.b16 %v1124, %v1116
        %v1549 = vpack.c.b16 %v1125, %v1117
        %v1550 = vpack.c.b16 %v1126, %v1118
        %v1551 = vpack.c.b16 %v1127, %v1119
        %v1552 = vpack.c.b16 %v1128, %v1120
        %v1553 = vpack.c.b16 %v1137, %v1129
        %v1554 = vpack.c.b16 %v1138, %v1130
        %v1555 = vpack.c.b16 %v1139, %v1131
        %v1556 = vpack.c.b16 %v1140, %v1132
        %v1557 = vpack.c.b16 %v1141, %v1133
        %v1558 = vpack.c.b16 %v1142, %v1134
        %v1559 = vpack.c.b16 %v1143, %v1135
        %v1560 = vpack.c.b16 %v1144, %v1136
        %v1561 = vpack.c.b16 %v1153, %v1145
        %v1562 = vpack.c.b16 %v1154, %v1146
        %v1563 = vpack.c.b16 %v1155, %v1147
        %v1564 = vpack.c.b16 %v1156, %v1148
        %v1565 = vpack.c.b16 %v1157, %v1149
        %v1566 = vpack.c.b16 %v1158, %v1150
        %v1567 = vpack.c.b16 %v1159, %v1151
        %v1568 = vpack.c.b16 %v1160, %v1152
        %v1569 = vpack.c.b16 %v1169, %v1161
        %v1570 = vpack.c.b16 %v1170, %v1162
        %v1571 = vpack.c.b16 %v1171, %v1163
        %v1572 = vpack.c.b16 %v1172, %v1164
        %v1573 = vpack.c.b16 %v1173, %v1165
        %v1574 = vpack.c.b16 %v1174, %v1166
        %v1575 = vpack.c.b16 %v1175, %v1167
        %v1576 = vpack.c.b16 %v1176, %v1168
        %v1577 = vpack.c.b16 %v1185, %v1177
        %v1578 = vpack.c.b16 %v1186, %v1178
        %v1579 = vpack.c.b16 %v1187, %v1179
        %v1580 = vpack.c.b16 %v1188, %v1180
        %v1581 = vpack.c.b16 %v1189, %v1181
        %v1582 = vpack.c.b16 %v1190, %v1182
        %v1583 = vpack.c.b16 %v1191, %v1183
        %v1584 = vpack.c.b16 %v1192, %v1184
        %v1585 = vpack.c.b16 %v1201, %v1193
        %v1586 = vpack.c.b16 %v1202, %v1194
        %v1587 = vpack.c.b16 %v1203, %v1195
        %v1588 = vpack.c.b16 %v1204, %v1196
        %v1589 = vpack.c.b16 %v1205, %v1197
        %v1590 = vpack.c.b16 %v1206, %v1198
        %v1591 = vpack.c.b16 %v1207, %v1199
        %v1592 = vpack.c.b16 %v1208, %v1200
        %v1593 = vpack.c.b16 %v1217, %v1209
        %v1594 = vpack.c.b16 %v1218, %v1210
        %v1595 = vpack.c.b16 %v1219, %v1211
        %v1596 = vpack.c.b16 %v1220, %v1212
        %v1597 = vpack.c.b16 %v1221, %v1213
        %v1598 = vpack.c.b16 %v1222, %v1214
        %v1599 = vpack.c.b16 %v1223, %v1215
        %v1600 = vpack.c.b16 %v1224, %v1216
        %v1601 = vpack.c.b16 %v1233, %v1225
        %v1602 = vpack.c.b16 %v1234, %v1226
        %v1603 = vpack.c.b16 %v1235, %v1227
        %v1604 = vpack.c.b16 %v1236, %v1228
        %v1605 = vpack.c.b16 %v1237, %v1229
        %v1606 = vpack.c.b16 %v1238, %v1230
        %v1607 = vpack.c.b16 %v1239, %v1231
        %v1608 = vpack.c.b16 %v1240, %v1232
        %v1609 = vpack.c.b16 %v1249, %v1241
        %v1610 = vpack.c.b16 %v1250, %v1242
        %v1611 = vpack.c.b16 %v1251, %v1243
        %v1612 = vpack.c.b16 %v1252, %v1244
        %v1613 = vpack.c.b16 %v1253, %v1245
        %v1614 = vpack.c.b16 %v1254, %v1246
        %v1615 = vpack.c.b16 %v1255, %v1247
        %v1616 = vpack.c.b16 %v1256, %v1248
        %v1617 = vpack.c.b16 %v1265, %v1257
        %v1618 = vpack.c.b16 %v1266, %v1258
        %v1619 = vpack.c.b16 %v1267, %v1259
        %v1620 = vpack.c.b16 %v1268, %v1260
        %v1621 = vpack.c.b16 %v1269, %v1261
        %v1622 = vpack.c.b16 %v1270, %v1262
        %v1623 = vpack.c.b16 %v1271, %v1263
        %v1624 = vpack.c.b16 %v1272, %v1264
        %v1625 = vpack.c.b16 %v1281, %v1273
        %v1626 = vpack.c.b16 %v1282, %v1274
        %v1627 = vpack.c.b16 %v1283, %v1275
        %v1628 = vpack.c.b16 %v1284, %v1276
        %v1629 = vpack.c.b16 %v1285, %v1277
        %v1630 = vpack.c.b16 %v1286, %v1278
        %v1631 = vpack.c.b16 %v1287, %v1279
        %v1632 = vpack.c.b16 %v1288, %v1280
        %v1633 = vpack.c.b16 %v1297, %v1289
        %v1634 = vpack.c.b16 %v1298, %v1290
        %v1635 = vpack.c.b16 %v1299, %v1291
        %v1636 = vpack.c.b16 %v1300, %v1292
        %v1637 = vpack.c.b16 %v1301, %v1293
        %v1638 = vpack.c.b16 %v1302, %v1294
        %v1639 = vpack.c.b16 %v1303, %v1295
        %v1640 = vpack.c.b16 %v1304, %v1296
        %v1641 = vpack.c.b16 %v1313, %v1305
        %v1642 = vpack.c.b16 %v1314, %v1306
        %v1643 = vpack.c.b16 %v1315, %v1307
        %v1644 = vpack.c.b16 %v1316, %v1308
        %v1645 = vpack.c.b16 %v1317, %v1309
        %v1646 = vpack.c.b16 %v1318, %v1310
        %v1647 = vpack.c.b16 %v1319, %v1311
        %v1648 = vpack.c.b16 %v1320, %v1312
        %v1649 = vpack.c.b16 %v1329, %v1321
        %v1650 = vpack.c.b16 %v1330, %v1322
        %v1651 = vpack.c.b16 %v1331, %v1323
        %v1652 = vpack.c.b16 %v1332, %v1324
        %v1653 = vpack.c.b16 %v1333, %v1325
        %v1654 = vpack.c.b16 %v1334, %v1326
        %v1655 = vpack.c.b16 %v1335, %v1327
        %v1656 = vpack.c.b16 %v1336, %v1328
        %v1657 = vpack.c.b16 %v1345, %v1337
        %v1658 = vpack.c.b16 %v1346, %v1338
        %v1659 = vpack.c.b16 %v1347, %v1339
        %v1660 = vpack.c.b16 %v1348, %v1340
        %v1661 = vpack.c.b16 %v1349, %v1341
        %v1662 = vpack.c.b16 %v1350, %v1342
        %v1663 = vpack.c.b16 %v1351, %v1343
        %v1664 = vpack.c.b16 %v1352, %v1344
        %v1665 = vpack.c.b16 %v1361, %v1353
        %v1666 = vpack.c.b16 %v1362, %v1354
        %v1667 = vpack.c.b16 %v1363, %v1355
        %v1668 = vpack.c.b16 %v1364, %v1356
        %v1669 = vpack.c.b16 %v1365, %v1357
        %v1670 = vpack.c.b16 %v1366, %v1358
        %v1671 = vpack.c.b16 %v1367, %v1359
        %v1672 = vpack.c.b16 %v1368, %v1360
        %v1673 = vpack.c.b16 %v1377, %v1369
        %v1674 = vpack.c.b16 %v1378, %v1370
        %v1675 = vpack.c.b16 %v1379, %v1371
        %v1676 = vpack.c.b16 %v1380, %v1372
        %v1677 = vpack.c.b16 %v1381, %v1373
        %v1678 = vpack.c.b16 %v1382, %v1374
        %v1679 = vpack.c.b16 %v1383, %v1375
        %v1680 = vpack.c.b16 %v1384, %v1376
        %v1681 = vpack.c.b16 %v1393, %v1385
        %v1682 = vpack.c.b16 %v1394, %v1386
        %v1683 = vpack.c.b16 %v1395, %v1387
        %v1684 = vpack.c.b16 %v1396, %v1388
        %v1685 = vpack.c.b16 %v1397, %v1389
        %v1686 = vpack.c.b16 %v1398, %v1390
        %v1687 = vpack.c.b16 %v1399, %v1391
        %v1688 = vpack.c.b16 %v1400, %v1392
        %v1689 = vpack.c.b16 %v1409, %v1401
        %v1690 = vpack.c.b16 %v1410, %v1402
        %v1691 = vpack.c.b16 %v1411, %v1403
        %v1692 = vpack.c.b16 %v1412, %v1404
        %v1693 = vpack.c.b16 %v1413, %v1405
        %v1694 = vpack.c.b16 %v1414, %v1406
        %v1695 = vpack.c.b16 %v1415, %v1407
        %v1696 = vpack.c.b16 %v1416, %v1408
        %v1697 = vpack.c.b16 %v1425, %v1417
        %v1698 = vpack.c.b16 %v1426, %v1418
        %v1699 = vpack.c.b16 %v1427, %v1419
        %v1700 = vpack.c.b16 %v1428, %v1420
        %v1701 = vpack.c.b16 %v1429, %v1421
        %v1702 = vpack.c.b16 %v1430, %v1422
        %v1703 = vpack.c.b16 %v1431, %v1423
        %v1704 = vpack.c.b16 %v1432, %v1424
        %v1705 = vpack.c.b16 %v1441, %v1433
        %v1706 = vpack.c.b16 %v1442, %v1434
        %v1707 = vpack.c.b16 %v1443, %v1435
        %v1708 = vpack.c.b16 %v1444, %v1436
        %v1709 = vpack.c.b16 %v1445, %v1437
        %v1710 = vpack.c.b16 %v1446, %v1438
        %v1711 = vpack.c.b16 %v1447, %v1439
        %v1712 = vpack.c.b16 %v1448, %v1440
        %v1713 = vpack.c.b16 %v1457, %v1449
        %v1714 = vpack.c.b16 %v1458, %v1450
        %v1715 = vpack.c.b16 %v1459, %v1451
        %v1716 = vpack.c.b16 %v1460, %v1452
        %v1717 = vpack.c.b16 %v1461, %v1453
        %v1718 = vpack.c.b16 %v1462, %v1454
        %v1719 = vpack.c.b16 %v1463, %v1455
        %v1720 = vpack.c.b16 %v1464, %v1456
        %1977 = vmatprep.subr.bf16.mxu0 %v1466
        %1978 = vmatpush1.bf16.xpose.msra.mxu0 %v1465
        %1979 = vmatprep.subr.bf16.mxu0 %v1474
        %1980 = vmatpush1.bf16.xpose.msra.mxu0 %v1473
        %1981 = vmatprep.subr.bf16.mxu0 %v1482
        %1982 = vmatpush1.bf16.xpose.msra.mxu0 %v1481
        %1983 = vmatprep.subr.bf16.mxu0 %v1490
        %1984 = vmatpush1.bf16.xpose.msra.mxu0 %v1489
        %1985 = vmatprep.subr.bf16.mxu0 %v1498
        %1986 = vmatpush1.bf16.xpose.msra.mxu0 %v1497
        %1987 = vmatprep.subr.bf16.mxu0 %v1506
        %1988 = vmatpush1.bf16.xpose.msra.mxu0 %v1505
        %1989 = vmatprep.subr.bf16.mxu0 %v1514
        %1990 = vmatpush1.bf16.xpose.msra.mxu0 %v1513
        %1991 = vmatprep.subr.bf16.mxu0 %v1522
        %1992 = vmatpush1.bf16.xpose.msra.mxu0 %v1521
        %1993 = vmatprep.subr.bf16.mxu0 %v1530
        %1994 = vmatpush1.bf16.xpose.msra.mxu0 %v1529
        %1995 = vmatprep.subr.bf16.mxu0 %v1538
        %1996 = vmatpush1.bf16.xpose.msra.mxu0 %v1537
        %1997 = vmatprep.subr.bf16.mxu0 %v1546
        %1998 = vmatpush1.bf16.xpose.msra.mxu0 %v1545
        %1999 = vmatprep.subr.bf16.mxu0 %v1554
        %2000 = vmatpush1.bf16.xpose.msra.mxu0 %v1553
        %2001 = vmatprep.subr.bf16.mxu0 %v1562
        %2002 = vmatpush1.bf16.xpose.msra.mxu0 %v1561
        %2003 = vmatprep.subr.bf16.mxu0 %v1570
        %2004 = vmatpush1.bf16.xpose.msra.mxu0 %v1569
        %2005 = vmatprep.subr.bf16.mxu0 %v1578
        %2006 = vmatpush1.bf16.xpose.msra.mxu0 %v1577
        %2007 = vmatprep.subr.bf16.mxu0 %v1586
        %2008 = vmatpush1.bf16.xpose.msra.mxu0 %v1585
        %2009 = vmatprep.mubr.bf16.mxu0 %v634
        %2010 = vmatmul.mubr.bf16.gmra.mrb[0].mxu0 %v633
        %v2011 = vpop.f32.mrb[0].mxu0
        %v2012 = vadd.f32 0.0, %v2011
        %v2013 = vpop.f32.mrb[0].mxu0
        %v2014 = vadd.f32 0.0, %v2013
        %v2015 = vpop.f32.mrb[0].mxu0
        %v2016 = vadd.f32 0.0, %v2015
        %v2017 = vpop.f32.mrb[0].mxu0
        %v2018 = vadd.f32 0.0, %v2017
        %2019 = vmatprep.mubr.bf16.mxu0 %v642
        %2020 = vmatmul.mubr.bf16.gmra.mrb[0].mxu0 %v641
        %v2021 = vpop.f32.mrb[0].mxu0
        %v2022 = vadd.f32 0.0, %v2021
        %v2023 = vpop.f32.mrb[0].mxu0
        %v2024 = vadd.f32 0.0, %v2023
        %v2025 = vpop.f32.mrb[0].mxu0
        %v2026 = vadd.f32 0.0, %v2025
        %v2027 = vpop.f32.mrb[0].mxu0
        %v2028 = vadd.f32 0.0, %v2027
        %2029 = vmatprep.mubr.bf16.mxu0 %v650
        %2030 = vmatmul.mubr.bf16.gmra.mrb[0].mxu0 %v649
        %v2031 = vpop.f32.mrb[0].mxu0
        %v2032 = vadd.f32 0.0, %v2031
        %v2033 = vpop.f32.mrb[0].mxu0
        %v2034 = vadd.f32 0.0, %v2033
        %v2035 = vpop.f32.mrb[0].mxu0
        %v2036 = vadd.f32 0.0, %v2035
        %v2037 = vpop.f32.mrb[0].mxu0
        %v2038 = vadd.f32 0.0, %v2037
        %2039 = vmatprep.mubr.bf16.mxu0 %v658
        %2040 = vmatmul.mubr.bf16.gmra.mrb[0].mxu0 %v657
        %v2041 = vpop.f32.mrb[0].mxu0
        %v2042 = vadd.f32 0.0, %v2041
        %v2043 = vpop.f32.mrb[0].mxu0
        %v2044 = vadd.f32 0.0, %v2043
        %v2045 = vpop.f32.mrb[0].mxu0
        %v2046 = vpop.f32.mrb[0].mxu0
        %2047 = vdwg.mxu0
        %2048 = vmatprep.subr.bf16.mxu0 %v1468
        %2049 = vmatpush1.bf16.xpose.msra.mxu0 %v1467
        %2050 = vmatprep.subr.bf16.mxu0 %v1476
        %2051 = vmatpush1.bf16.xpose.msra.mxu0 %v1475
        %2052 = vmatprep.subr.bf16.mxu0 %v1484
        %2053 = vmatpush1.bf16.xpose.msra.mxu0 %v1483
        %2054 = vmatprep.subr.bf16.mxu0 %v1492
        %2055 = vmatpush1.bf16.xpose.msra.mxu0 %v1491
        %2056 = vmatprep.subr.bf16.mxu0 %v1500
        %2057 = vmatpush1.bf16.xpose.msra.mxu0 %v1499
        %2058 = vmatprep.subr.bf16.mxu0 %v1508
        %2059 = vmatpush1.bf16.xpose.msra.mxu0 %v1507
        %2060 = vmatprep.subr.bf16.mxu0 %v1516
        %2061 = vmatpush1.bf16.xpose.msra.mxu0 %v1515
        %2062 = vmatprep.subr.bf16.mxu0 %v1524
        %2063 = vmatpush1.bf16.xpose.msra.mxu0 %v1523
        %2064 = vmatprep.subr.bf16.mxu0 %v1532
        %2065 = vmatpush1.bf16.xpose.msra.mxu0 %v1531
        %2066 = vmatprep.subr.bf16.mxu0 %v1540
        %2067 = vmatpush1.bf16.xpose.msra.mxu0 %v1539
        %2068 = vmatprep.subr.bf16.mxu0 %v1548
        %2069 = vmatpush1.bf16.xpose.msra.mxu0 %v1547
        %2070 = vmatprep.subr.bf16.mxu0 %v1556
        %2071 = vmatpush1.bf16.xpose.msra.mxu0 %v1555
        %2072 = vmatprep.subr.bf16.mxu0 %v1564
        %2073 = vmatpush1.bf16.xpose.msra.mxu0 %v1563
        %2074 = vmatprep.subr.bf16.mxu0 %v1572
        %2075 = vmatpush1.bf16.xpose.msra.mxu0 %v1571
        %2076 = vmatprep.subr.bf16.mxu0 %v1580
        %2077 = vmatpush1.bf16.xpose.msra.mxu0 %v1579
        %2078 = vmatprep.subr.bf16.mxu0 %v1588
        %2079 = vmatpush1.bf16.xpose.msra.mxu0 %v1587
        %2080 = vmatprep.mubr.bf16.mxu0 %v636
        %2081 = vmatmul.mubr.bf16.gmra.mrb[0].mxu0 %v635
        %v2082 = vpop.f32.mrb[0].mxu0
        %v2083 = vadd.f32 %v2012, %v2082
        %v2084 = vpop.f32.mrb[0].mxu0
        %v2085 = vadd.f32 %v2014, %v2084
        %v2086 = vpop.f32.mrb[0].mxu0
        %v2087 = vadd.f32 %v2016, %v2086
        %v2088 = vpop.f32.mrb[0].mxu0
        %v2089 = vadd.f32 %v2018, %v2088
        %2090 = vmatprep.mubr.bf16.mxu0 %v644
        %2091 = vmatmul.mubr.bf16.gmra.mrb[0].mxu0 %v643
        %v2092 = vpop.f32.mrb[0].mxu0
        %v2093 = vadd.f32 %v2022, %v2092
        %v2094 = vpop.f32.mrb[0].mxu0
        %v2095 = vadd.f32 %v2024, %v2094
        %v2096 = vpop.f32.mrb[0].mxu0
        %v2097 = vadd.f32 %v2026, %v2096
        %v2098 = vpop.f32.mrb[0].mxu0
        %v2099 = vadd.f32 %v2028, %v2098
        %2100 = vmatprep.mubr.bf16.mxu0 %v652
        %2101 = vmatmul.mubr.bf16.gmra.mrb[0].mxu0 %v651
        %v2102 = vpop.f32.mrb[0].mxu0
        %v2103 = vadd.f32 %v2032, %v2102
        %v2104 = vpop.f32.mrb[0].mxu0
        %v2105 = vadd.f32 %v2034, %v2104
        %v2106 = vpop.f32.mrb[0].mxu0
        %v2107 = vadd.f32 %v2036, %v2106
        %v2108 = vpop.f32.mrb[0].mxu0
        %v2109 = vadd.f32 %v2038, %v2108
        %2110 = vmatprep.mubr.bf16.mxu0 %v660
        %2111 = vmatmul.mubr.bf16.gmra.mrb[0].mxu0 %v659
        %v2112 = vpop.f32.mrb[0].mxu0
        %v2113 = vadd.f32 %v2042, %v2112
        %v2114 = vpop.f32.mrb[0].mxu0
        %v2115 = vadd.f32 %v2044, %v2114
        %v2116 = vpop.f32.mrb[0].mxu0
        %v2117 = vpop.f32.mrb[0].mxu0
        %2118 = vdwg.mxu0
        %2119 = vmatprep.subr.bf16.mxu0 %v1470
        %2120 = vmatpush1.bf16.xpose.msra.mxu0 %v1469
        %2121 = vmatprep.subr.bf16.mxu0 %v1478
        %2122 = vmatpush1.bf16.xpose.msra.mxu0 %v1477
        %2123 = vmatprep.subr.bf16.mxu0 %v1486
        %2124 = vmatpush1.bf16.xpose.msra.mxu0 %v1485
        %2125 = vmatprep.subr.bf16.mxu0 %v1494
        %2126 = vmatpush1.bf16.xpose.msra.mxu0 %v1493
        %2127 = vmatprep.subr.bf16.mxu0 %v1502
        %2128 = vmatpush1.bf16.xpose.msra.mxu0 %v1501
        %2129 = vmatprep.subr.bf16.mxu0 %v1510
        %2130 = vmatpush1.bf16.xpose.msra.mxu0 %v1509
        %2131 = vmatprep.subr.bf16.mxu0 %v1518
        %2132 = vmatpush1.bf16.xpose.msra.mxu0 %v1517
        %2133 = vmatprep.subr.bf16.mxu0 %v1526
        %2134 = vmatpush1.bf16.xpose.msra.mxu0 %v1525
        %2135 = vmatprep.subr.bf16.mxu0 %v1534
        %2136 = vmatpush1.bf16.xpose.msra.mxu0 %v1533
        %2137 = vmatprep.subr.bf16.mxu0 %v1542
        %2138 = vmatpush1.bf16.xpose.msra.mxu0 %v1541
        %2139 = vmatprep.subr.bf16.mxu0 %v1550
        %2140 = vmatpush1.bf16.xpose.msra.mxu0 %v1549
        %2141 = vmatprep.subr.bf16.mxu0 %v1558
        %2142 = vmatpush1.bf16.xpose.msra.mxu0 %v1557
        %2143 = vmatprep.subr.bf16.mxu0 %v1566
        %2144 = vmatpush1.bf16.xpose.msra.mxu0 %v1565
        %2145 = vmatprep.subr.bf16.mxu0 %v1574
        %2146 = vmatpush1.bf16.xpose.msra.mxu0 %v1573
        %2147 = vmatprep.subr.bf16.mxu0 %v1582
        %2148 = vmatpush1.bf16.xpose.msra.mxu0 %v1581
        %2149 = vmatprep.subr.bf16.mxu0 %v1590
        %2150 = vmatpush1.bf16.xpose.msra.mxu0 %v1589
        %2151 = vmatprep.mubr.bf16.mxu0 %v638
        %2152 = vmatmul.mubr.bf16.gmra.mrb[0].mxu0 %v637
        %v2153 = vpop.f32.mrb[0].mxu0
        %v2154 = vadd.f32 %v2083, %v2153
        %v2155 = vpop.f32.mrb[0].mxu0
        %v2156 = vadd.f32 %v2085, %v2155
        %v2157 = vpop.f32.mrb[0].mxu0
        %v2158 = vadd.f32 %v2087, %v2157
        %v2159 = vpop.f32.mrb[0].mxu0
        %v2160 = vadd.f32 %v2089, %v2159
        %2161 = vmatprep.mubr.bf16.mxu0 %v646
        %2162 = vmatmul.mubr.bf16.gmra.mrb[0].mxu0 %v645
        %v2163 = vpop.f32.mrb[0].mxu0
        %v2164 = vadd.f32 %v2093, %v2163
        %v2165 = vpop.f32.mrb[0].mxu0
        %v2166 = vadd.f32 %v2095, %v2165
        %v2167 = vpop.f32.mrb[0].mxu0
        %v2168 = vadd.f32 %v2097, %v2167
        %v2169 = vpop.f32.mrb[0].mxu0
        %v2170 = vadd.f32 %v2099, %v2169
        %2171 = vmatprep.mubr.bf16.mxu0 %v654
        %2172 = vmatmul.mubr.bf16.gmra.mrb[0].mxu0 %v653
        %v2173 = vpop.f32.mrb[0].mxu0
        %v2174 = vadd.f32 %v2103, %v2173
        %v2175 = vpop.f32.mrb[0].mxu0
        %v2176 = vadd.f32 %v2105, %v2175
        %v2177 = vpop.f32.mrb[0].mxu0
        %v2178 = vadd.f32 %v2107, %v2177
        %v2179 = vpop.f32.mrb[0].mxu0
        %v2180 = vadd.f32 %v2109, %v2179
        %2181 = vmatprep.mubr.bf16.mxu0 %v662
        %2182 = vmatmul.mubr.bf16.gmra.mrb[0].mxu0 %v661
        %v2183 = vpop.f32.mrb[0].mxu0
        %v2184 = vadd.f32 %v2113, %v2183
        %v2185 = vpop.f32.mrb[0].mxu0
        %v2186 = vadd.f32 %v2115, %v2185
        %v2187 = vpop.f32.mrb[0].mxu0
        %v2188 = vpop.f32.mrb[0].mxu0
        %2189 = vdwg.mxu0
        %2190 = vmatprep.subr.bf16.mxu0 %v1472
        %2191 = vmatpush1.bf16.xpose.msra.mxu0 %v1471
        %2192 = vmatprep.subr.bf16.mxu0 %v1480
        %2193 = vmatpush1.bf16.xpose.msra.mxu0 %v1479
        %2194 = vmatprep.subr.bf16.mxu0 %v1488
        %2195 = vmatpush1.bf16.xpose.msra.mxu0 %v1487
        %2196 = vmatprep.subr.bf16.mxu0 %v1496
        %2197 = vmatpush1.bf16.xpose.msra.mxu0 %v1495
        %2198 = vmatprep.subr.bf16.mxu0 %v1504
        %2199 = vmatpush1.bf16.xpose.msra.mxu0 %v1503
        %2200 = vmatprep.subr.bf16.mxu0 %v1512
        %2201 = vmatpush1.bf16.xpose.msra.mxu0 %v1511
        %2202 = vmatprep.subr.bf16.mxu0 %v1520
        %2203 = vmatpush1.bf16.xpose.msra.mxu0 %v1519
        %2204 = vmatprep.subr.bf16.mxu0 %v1528
        %2205 = vmatpush1.bf16.xpose.msra.mxu0 %v1527
        %2206 = vmatprep.subr.bf16.mxu0 %v1536
        %2207 = vmatpush1.bf16.xpose.msra.mxu0 %v1535
        %2208 = vmatprep.subr.bf16.mxu0 %v1544
        %2209 = vmatpush1.bf16.xpose.msra.mxu0 %v1543
        %2210 = vmatprep.subr.bf16.mxu0 %v1552
        %2211 = vmatpush1.bf16.xpose.msra.mxu0 %v1551
        %2212 = vmatprep.subr.bf16.mxu0 %v1560
        %2213 = vmatpush1.bf16.xpose.msra.mxu0 %v1559
        %2214 = vmatprep.subr.bf16.mxu0 %v1568
        %2215 = vmatpush1.bf16.xpose.msra.mxu0 %v1567
        %2216 = vmatprep.subr.bf16.mxu0 %v1576
        %2217 = vmatpush1.bf16.xpose.msra.mxu0 %v1575
        %2218 = vmatprep.subr.bf16.mxu0 %v1584
        %2219 = vmatpush1.bf16.xpose.msra.mxu0 %v1583
        %2220 = vmatprep.subr.bf16.mxu0 %v1592
        %2221 = vmatpush1.bf16.xpose.msra.mxu0 %v1591
        %2222 = vmatprep.mubr.bf16.mxu0 %v640
        %2223 = vmatmul.mubr.bf16.gmra.mrb[0].mxu0 %v639
        %v2224 = vpop.f32.mrb[0].mxu0
        %v2225 = vadd.f32 %v2154, %v2224
        %v2226 = vpop.f32.mrb[0].mxu0
        %v2227 = vadd.f32 %v2156, %v2226
        %v2228 = vpop.f32.mrb[0].mxu0
        %v2229 = vadd.f32 %v2158, %v2228
        %v2230 = vpop.f32.mrb[0].mxu0
        %v2231 = vadd.f32 %v2160, %v2230
        %2232 = vmatprep.mubr.bf16.mxu0 %v648
        %2233 = vmatmul.mubr.bf16.gmra.mrb[0].mxu0 %v647
        %v2234 = vpop.f32.mrb[0].mxu0
        %v2235 = vadd.f32 %v2164, %v2234
        %v2236 = vpop.f32.mrb[0].mxu0
        %v2237 = vadd.f32 %v2166, %v2236
        %v2238 = vpop.f32.mrb[0].mxu0
        %v2239 = vadd.f32 %v2168, %v2238
        %v2240 = vpop.f32.mrb[0].mxu0
        %v2241 = vadd.f32 %v2170, %v2240
        %2242 = vmatprep.mubr.bf16.mxu0 %v656
        %2243 = vmatmul.mubr.bf16.gmra.mrb[0].mxu0 %v655
        %v2244 = vpop.f32.mrb[0].mxu0
        %v2245 = vadd.f32 %v2174, %v2244
        %v2246 = vpop.f32.mrb[0].mxu0
        %v2247 = vadd.f32 %v2176, %v2246
        %v2248 = vpop.f32.mrb[0].mxu0
        %v2249 = vadd.f32 %v2178, %v2248
        %v2250 = vpop.f32.mrb[0].mxu0
        %v2251 = vadd.f32 %v2180, %v2250
        %2252 = vmatprep.mubr.bf16.mxu0 %v664
        %2253 = vmatmul.mubr.bf16.gmra.mrb[0].mxu0 %v663
        %v2254 = vpop.f32.mrb[0].mxu0
        %v2255 = vadd.f32 %v2184, %v2254
        %v2256 = vpop.f32.mrb[0].mxu0
        %v2257 = vadd.f32 %v2186, %v2256
        %v2258 = vpop.f32.mrb[0].mxu0
        %v2259 = vpop.f32.mrb[0].mxu0
        %2260 = vdwg.mxu0
        %2261 = vmatprep.subr.bf16.mxu0 %v1594
        %2262 = vmatpush1.bf16.xpose.msra.mxu0 %v1593
        %2263 = vmatprep.subr.bf16.mxu0 %v1602
        %2264 = vmatpush1.bf16.xpose.msra.mxu0 %v1601
        %2265 = vmatprep.subr.bf16.mxu0 %v1610
        %2266 = vmatpush1.bf16.xpose.msra.mxu0 %v1609
        %2267 = vmatprep.subr.bf16.mxu0 %v1618
        %2268 = vmatpush1.bf16.xpose.msra.mxu0 %v1617
        %2269 = vmatprep.subr.bf16.mxu0 %v1626
        %2270 = vmatpush1.bf16.xpose.msra.mxu0 %v1625
        %2271 = vmatprep.subr.bf16.mxu0 %v1634
        %2272 = vmatpush1.bf16.xpose.msra.mxu0 %v1633
        %2273 = vmatprep.subr.bf16.mxu0 %v1642
        %2274 = vmatpush1.bf16.xpose.msra.mxu0 %v1641
        %2275 = vmatprep.subr.bf16.mxu0 %v1650
        %2276 = vmatpush1.bf16.xpose.msra.mxu0 %v1649
        %2277 = vmatprep.subr.bf16.mxu0 %v1658
        %2278 = vmatpush1.bf16.xpose.msra.mxu0 %v1657
        %2279 = vmatprep.subr.bf16.mxu0 %v1666
        %2280 = vmatpush1.bf16.xpose.msra.mxu0 %v1665
        %2281 = vmatprep.subr.bf16.mxu0 %v1674
        %2282 = vmatpush1.bf16.xpose.msra.mxu0 %v1673
        %2283 = vmatprep.subr.bf16.mxu0 %v1682
        %2284 = vmatpush1.bf16.xpose.msra.mxu0 %v1681
        %2285 = vmatprep.subr.bf16.mxu0 %v1690
        %2286 = vmatpush1.bf16.xpose.msra.mxu0 %v1689
        %2287 = vmatprep.subr.bf16.mxu0 %v1698
        %2288 = vmatpush1.bf16.xpose.msra.mxu0 %v1697
        %2289 = vmatprep.subr.bf16.mxu0 %v1706
        %2290 = vmatpush1.bf16.xpose.msra.mxu0 %v1705
        %2291 = vmatprep.subr.bf16.mxu0 %v1714
        %2292 = vmatpush1.bf16.xpose.msra.mxu0 %v1713
        %2293 = vmatprep.mubr.bf16.mxu0 %v634
        %2294 = vmatmul.mubr.bf16.gmra.mrb[0].mxu0 %v633
        %v2295 = vpop.f32.mrb[0].mxu0
        %v2296 = vadd.f32 0.0, %v2295
        %v2297 = vpop.f32.mrb[0].mxu0
        %v2298 = vadd.f32 0.0, %v2297
        %v2299 = vpop.f32.mrb[0].mxu0
        %v2300 = vadd.f32 0.0, %v2299
        %v2301 = vpop.f32.mrb[0].mxu0
        %v2302 = vadd.f32 0.0, %v2301
        %2303 = vmatprep.mubr.bf16.mxu0 %v642
        %2304 = vmatmul.mubr.bf16.gmra.mrb[0].mxu0 %v641
        %v2305 = vpop.f32.mrb[0].mxu0
        %v2306 = vadd.f32 0.0, %v2305
        %v2307 = vpop.f32.mrb[0].mxu0
        %v2308 = vadd.f32 0.0, %v2307
        %v2309 = vpop.f32.mrb[0].mxu0
        %v2310 = vadd.f32 0.0, %v2309
        %v2311 = vpop.f32.mrb[0].mxu0
        %v2312 = vadd.f32 0.0, %v2311
        %2313 = vmatprep.mubr.bf16.mxu0 %v650
        %2314 = vmatmul.mubr.bf16.gmra.mrb[0].mxu0 %v649
        %v2315 = vpop.f32.mrb[0].mxu0
        %v2316 = vadd.f32 0.0, %v2315
        %v2317 = vpop.f32.mrb[0].mxu0
        %v2318 = vadd.f32 0.0, %v2317
        %v2319 = vpop.f32.mrb[0].mxu0
        %v2320 = vadd.f32 0.0, %v2319
        %v2321 = vpop.f32.mrb[0].mxu0
        %v2322 = vadd.f32 0.0, %v2321
        %2323 = vmatprep.mubr.bf16.mxu0 %v658
        %2324 = vmatmul.mubr.bf16.gmra.mrb[0].mxu0 %v657
        %v2325 = vpop.f32.mrb[0].mxu0
        %v2326 = vadd.f32 0.0, %v2325
        %v2327 = vpop.f32.mrb[0].mxu0
        %v2328 = vadd.f32 0.0, %v2327
        %v2329 = vpop.f32.mrb[0].mxu0
        %v2330 = vpop.f32.mrb[0].mxu0
        %2331 = vdwg.mxu0
        %2332 = vmatprep.subr.bf16.mxu0 %v1596
        %2333 = vmatpush1.bf16.xpose.msra.mxu0 %v1595
        %2334 = vmatprep.subr.bf16.mxu0 %v1604
        %2335 = vmatpush1.bf16.xpose.msra.mxu0 %v1603
        %2336 = vmatprep.subr.bf16.mxu0 %v1612
        %2337 = vmatpush1.bf16.xpose.msra.mxu0 %v1611
        %2338 = vmatprep.subr.bf16.mxu0 %v1620
        %2339 = vmatpush1.bf16.xpose.msra.mxu0 %v1619
        %2340 = vmatprep.subr.bf16.mxu0 %v1628
        %2341 = vmatpush1.bf16.xpose.msra.mxu0 %v1627
        %2342 = vmatprep.subr.bf16.mxu0 %v1636
        %2343 = vmatpush1.bf16.xpose.msra.mxu0 %v1635
        %2344 = vmatprep.subr.bf16.mxu0 %v1644
        %2345 = vmatpush1.bf16.xpose.msra.mxu0 %v1643
        %2346 = vmatprep.subr.bf16.mxu0 %v1652
        %2347 = vmatpush1.bf16.xpose.msra.mxu0 %v1651
        %2348 = vmatprep.subr.bf16.mxu0 %v1660
        %2349 = vmatpush1.bf16.xpose.msra.mxu0 %v1659
        %2350 = vmatprep.subr.bf16.mxu0 %v1668
        %2351 = vmatpush1.bf16.xpose.msra.mxu0 %v1667
        %2352 = vmatprep.subr.bf16.mxu0 %v1676
        %2353 = vmatpush1.bf16.xpose.msra.mxu0 %v1675
        %2354 = vmatprep.subr.bf16.mxu0 %v1684
        %2355 = vmatpush1.bf16.xpose.msra.mxu0 %v1683
        %2356 = vmatprep.subr.bf16.mxu0 %v1692
        %2357 = vmatpush1.bf16.xpose.msra.mxu0 %v1691
        %2358 = vmatprep.subr.bf16.mxu0 %v1700
        %2359 = vmatpush1.bf16.xpose.msra.mxu0 %v1699
        %2360 = vmatprep.subr.bf16.mxu0 %v1708
        %2361 = vmatpush1.bf16.xpose.msra.mxu0 %v1707
        %2362 = vmatprep.subr.bf16.mxu0 %v1716
        %2363 = vmatpush1.bf16.xpose.msra.mxu0 %v1715
        %2364 = vmatprep.mubr.bf16.mxu0 %v636
        %2365 = vmatmul.mubr.bf16.gmra.mrb[0].mxu0 %v635
        %v2366 = vpop.f32.mrb[0].mxu0
        %v2367 = vadd.f32 %v2296, %v2366
        %v2368 = vpop.f32.mrb[0].mxu0
        %v2369 = vadd.f32 %v2298, %v2368
        %v2370 = vpop.f32.mrb[0].mxu0
        %v2371 = vadd.f32 %v2300, %v2370
        %v2372 = vpop.f32.mrb[0].mxu0
        %v2373 = vadd.f32 %v2302, %v2372
        %2374 = vmatprep.mubr.bf16.mxu0 %v644
        %2375 = vmatmul.mubr.bf16.gmra.mrb[0].mxu0 %v643
        %v2376 = vpop.f32.mrb[0].mxu0
        %v2377 = vadd.f32 %v2306, %v2376
        %v2378 = vpop.f32.mrb[0].mxu0
        %v2379 = vadd.f32 %v2308, %v2378
        %v2380 = vpop.f32.mrb[0].mxu0
        %v2381 = vadd.f32 %v2310, %v2380
        %v2382 = vpop.f32.mrb[0].mxu0
        %v2383 = vadd.f32 %v2312, %v2382
        %2384 = vmatprep.mubr.bf16.mxu0 %v652
        %2385 = vmatmul.mubr.bf16.gmra.mrb[0].mxu0 %v651
        %v2386 = vpop.f32.mrb[0].mxu0
        %v2387 = vadd.f32 %v2316, %v2386
        %v2388 = vpop.f32.mrb[0].mxu0
        %v2389 = vadd.f32 %v2318, %v2388
        %v2390 = vpop.f32.mrb[0].mxu0
        %v2391 = vadd.f32 %v2320, %v2390
        %v2392 = vpop.f32.mrb[0].mxu0
        %v2393 = vadd.f32 %v2322, %v2392
        %2394 = vmatprep.mubr.bf16.mxu0 %v660
        %2395 = vmatmul.mubr.bf16.gmra.mrb[0].mxu0 %v659
        %v2396 = vpop.f32.mrb[0].mxu0
        %v2397 = vadd.f32 %v2326, %v2396
        %v2398 = vpop.f32.mrb[0].mxu0
        %v2399 = vadd.f32 %v2328, %v2398
        %v2400 = vpop.f32.mrb[0].mxu0
        %v2401 = vpop.f32.mrb[0].mxu0
        %2402 = vdwg.mxu0
        %2403 = vmatprep.subr.bf16.mxu0 %v1598
        %2404 = vmatpush1.bf16.xpose.msra.mxu0 %v1597
        %2405 = vmatprep.subr.bf16.mxu0 %v1606
        %2406 = vmatpush1.bf16.xpose.msra.mxu0 %v1605
        %2407 = vmatprep.subr.bf16.mxu0 %v1614
        %2408 = vmatpush1.bf16.xpose.msra.mxu0 %v1613
        %2409 = vmatprep.subr.bf16.mxu0 %v1622
        %2410 = vmatpush1.bf16.xpose.msra.mxu0 %v1621
        %2411 = vmatprep.subr.bf16.mxu0 %v1630
        %2412 = vmatpush1.bf16.xpose.msra.mxu0 %v1629
        %2413 = vmatprep.subr.bf16.mxu0 %v1638
        %2414 = vmatpush1.bf16.xpose.msra.mxu0 %v1637
        %2415 = vmatprep.subr.bf16.mxu0 %v1646
        %2416 = vmatpush1.bf16.xpose.msra.mxu0 %v1645
        %2417 = vmatprep.subr.bf16.mxu0 %v1654
        %2418 = vmatpush1.bf16.xpose.msra.mxu0 %v1653
        %2419 = vmatprep.subr.bf16.mxu0 %v1662
        %2420 = vmatpush1.bf16.xpose.msra.mxu0 %v1661
        %2421 = vmatprep.subr.bf16.mxu0 %v1670
        %2422 = vmatpush1.bf16.xpose.msra.mxu0 %v1669
        %2423 = vmatprep.subr.bf16.mxu0 %v1678
        %2424 = vmatpush1.bf16.xpose.msra.mxu0 %v1677
        %2425 = vmatprep.subr.bf16.mxu0 %v1686
        %2426 = vmatpush1.bf16.xpose.msra.mxu0 %v1685
        %2427 = vmatprep.subr.bf16.mxu0 %v1694
        %2428 = vmatpush1.bf16.xpose.msra.mxu0 %v1693
        %2429 = vmatprep.subr.bf16.mxu0 %v1702
        %2430 = vmatpush1.bf16.xpose.msra.mxu0 %v1701
        %2431 = vmatprep.subr.bf16.mxu0 %v1710
        %2432 = vmatpush1.bf16.xpose.msra.mxu0 %v1709
        %2433 = vmatprep.subr.bf16.mxu0 %v1718
        %2434 = vmatpush1.bf16.xpose.msra.mxu0 %v1717
        %2435 = vmatprep.mubr.bf16.mxu0 %v638
        %2436 = vmatmul.mubr.bf16.gmra.mrb[0].mxu0 %v637
        %v2437 = vpop.f32.mrb[0].mxu0
        %v2438 = vadd.f32 %v2367, %v2437
        %v2439 = vpop.f32.mrb[0].mxu0
        %v2440 = vadd.f32 %v2369, %v2439
        %v2441 = vpop.f32.mrb[0].mxu0
        %v2442 = vadd.f32 %v2371, %v2441
        %v2443 = vpop.f32.mrb[0].mxu0
        %v2444 = vadd.f32 %v2373, %v2443
        %2445 = vmatprep.mubr.bf16.mxu0 %v646
        %2446 = vmatmul.mubr.bf16.gmra.mrb[0].mxu0 %v645
        %v2447 = vpop.f32.mrb[0].mxu0
        %v2448 = vadd.f32 %v2377, %v2447
        %v2449 = vpop.f32.mrb[0].mxu0
        %v2450 = vadd.f32 %v2379, %v2449
        %v2451 = vpop.f32.mrb[0].mxu0
        %v2452 = vadd.f32 %v2381, %v2451
        %v2453 = vpop.f32.mrb[0].mxu0
        %v2454 = vadd.f32 %v2383, %v2453
        %2455 = vmatprep.mubr.bf16.mxu0 %v654
        %2456 = vmatmul.mubr.bf16.gmra.mrb[0].mxu0 %v653
        %v2457 = vpop.f32.mrb[0].mxu0
        %v2458 = vadd.f32 %v2387, %v2457
        %v2459 = vpop.f32.mrb[0].mxu0
        %v2460 = vadd.f32 %v2389, %v2459
        %v2461 = vpop.f32.mrb[0].mxu0
        %v2462 = vadd.f32 %v2391, %v2461
        %v2463 = vpop.f32.mrb[0].mxu0
        %v2464 = vadd.f32 %v2393, %v2463
        %2465 = vmatprep.mubr.bf16.mxu0 %v662
        %2466 = vmatmul.mubr.bf16.gmra.mrb[0].mxu0 %v661
        %v2467 = vpop.f32.mrb[0].mxu0
        %v2468 = vadd.f32 %v2397, %v2467
        %v2469 = vpop.f32.mrb[0].mxu0
        %v2470 = vadd.f32 %v2399, %v2469
        %v2471 = vpop.f32.mrb[0].mxu0
        %v2472 = vpop.f32.mrb[0].mxu0
        %2473 = vdwg.mxu0
        %2474 = vmatprep.subr.bf16.mxu0 %v1600
        %2475 = vmatpush1.bf16.xpose.msra.mxu0 %v1599
        %2476 = vmatprep.subr.bf16.mxu0 %v1608
        %2477 = vmatpush1.bf16.xpose.msra.mxu0 %v1607
        %2478 = vmatprep.subr.bf16.mxu0 %v1616
        %2479 = vmatpush1.bf16.xpose.msra.mxu0 %v1615
        %2480 = vmatprep.subr.bf16.mxu0 %v1624
        %2481 = vmatpush1.bf16.xpose.msra.mxu0 %v1623
        %2482 = vmatprep.subr.bf16.mxu0 %v1632
        %2483 = vmatpush1.bf16.xpose.msra.mxu0 %v1631
        %2484 = vmatprep.subr.bf16.mxu0 %v1640
        %2485 = vmatpush1.bf16.xpose.msra.mxu0 %v1639
        %2486 = vmatprep.subr.bf16.mxu0 %v1648
        %2487 = vmatpush1.bf16.xpose.msra.mxu0 %v1647
        %2488 = vmatprep.subr.bf16.mxu0 %v1656
        %2489 = vmatpush1.bf16.xpose.msra.mxu0 %v1655
        %2490 = vmatprep.subr.bf16.mxu0 %v1664
        %2491 = vmatpush1.bf16.xpose.msra.mxu0 %v1663
        %2492 = vmatprep.subr.bf16.mxu0 %v1672
        %2493 = vmatpush1.bf16.xpose.msra.mxu0 %v1671
        %2494 = vmatprep.subr.bf16.mxu0 %v1680
        %2495 = vmatpush1.bf16.xpose.msra.mxu0 %v1679
        %2496 = vmatprep.subr.bf16.mxu0 %v1688
        %2497 = vmatpush1.bf16.xpose.msra.mxu0 %v1687
        %2498 = vmatprep.subr.bf16.mxu0 %v1696
        %2499 = vmatpush1.bf16.xpose.msra.mxu0 %v1695
        %2500 = vmatprep.subr.bf16.mxu0 %v1704
        %2501 = vmatpush1.bf16.xpose.msra.mxu0 %v1703
        %2502 = vmatprep.subr.bf16.mxu0 %v1712
        %2503 = vmatpush1.bf16.xpose.msra.mxu0 %v1711
        %2504 = vmatprep.subr.bf16.mxu0 %v1720
        %2505 = vmatpush1.bf16.xpose.msra.mxu0 %v1719
        %2506 = vmatprep.mubr.bf16.mxu0 %v640
        %2507 = vmatmul.mubr.bf16.gmra.mrb[0].mxu0 %v639
        %v2508 = vpop.f32.mrb[0].mxu0
        %v2509 = vadd.f32 %v2438, %v2508
        %v2510 = vpop.f32.mrb[0].mxu0
        %v2511 = vadd.f32 %v2440, %v2510
        %v2512 = vpop.f32.mrb[0].mxu0
        %v2513 = vadd.f32 %v2442, %v2512
        %v2514 = vpop.f32.mrb[0].mxu0
        %v2515 = vadd.f32 %v2444, %v2514
        %2516 = vmatprep.mubr.bf16.mxu0 %v648
        %2517 = vmatmul.mubr.bf16.gmra.mrb[0].mxu0 %v647
        %v2518 = vpop.f32.mrb[0].mxu0
        %v2519 = vadd.f32 %v2448, %v2518
        %v2520 = vpop.f32.mrb[0].mxu0
        %v2521 = vadd.f32 %v2450, %v2520
        %v2522 = vpop.f32.mrb[0].mxu0
        %v2523 = vadd.f32 %v2452, %v2522
        %v2524 = vpop.f32.mrb[0].mxu0
        %v2525 = vadd.f32 %v2454, %v2524
        %2526 = vmatprep.mubr.bf16.mxu0 %v656
        %2527 = vmatmul.mubr.bf16.gmra.mrb[0].mxu0 %v655
        %v2528 = vpop.f32.mrb[0].mxu0
        %v2529 = vadd.f32 %v2458, %v2528
        %v2530 = vpop.f32.mrb[0].mxu0
        %v2531 = vadd.f32 %v2460, %v2530
        %v2532 = vpop.f32.mrb[0].mxu0
        %v2533 = vadd.f32 %v2462, %v2532
        %v2534 = vpop.f32.mrb[0].mxu0
        %v2535 = vadd.f32 %v2464, %v2534
        %2536 = vmatprep.mubr.bf16.mxu0 %v664
        %2537 = vmatmul.mubr.bf16.gmra.mrb[0].mxu0 %v663
        %v2538 = vpop.f32.mrb[0].mxu0
        %v2539 = vadd.f32 %v2468, %v2538
        %v2540 = vpop.f32.mrb[0].mxu0
        %v2541 = vadd.f32 %v2470, %v2540
        %v2542 = vpop.f32.mrb[0].mxu0
        %v2543 = vpop.f32.mrb[0].mxu0
        %2544 = vdwg.mxu0
        %v2545 = vadd.f32 %v2225, %v2229
        %v2546 = vadd.f32 %v2545, %v2235
        %v2547 = vadd.f32 %v2546, %v2239
        %v2548 = vadd.f32 %v2547, %v2245
        %v2549 = vadd.f32 %v2548, %v2249
        %vm2550 = vcmask 1040384
        %v2551 = vsel %vm2550, %v2255, 0.0
        %v2552 = vadd.f32 %v2549, %v2551
        %v2553 = vrot.slane %v2552, 4
        %v2554 = vadd.f32 %v2552, %v2553
        %v2555 = vrot.slane %v2554, 2
        %v2556 = vadd.f32 %v2554, %v2555
        %v2557 = vrot.slane %v2556, 1
        %v2558 = vadd.f32 %v2556, %v2557
        %v2559 = vadd.f32 %v2227, %v2231
        %v2560 = vadd.f32 %v2559, %v2237
        %v2561 = vadd.f32 %v2560, %v2241
        %v2562 = vadd.f32 %v2561, %v2247
        %v2563 = vadd.f32 %v2562, %v2251
        %v2564 = vsel %vm2550, %v2257, 0.0
        %v2565 = vadd.f32 %v2563, %v2564
        %v2566 = vrot.slane %v2565, 4
        %v2567 = vadd.f32 %v2565, %v2566
        %v2568 = vrot.slane %v2567, 2
        %v2569 = vadd.f32 %v2567, %v2568
        %v2570 = vrot.slane %v2569, 1
        %v2571 = vadd.f32 %v2569, %v2570
        %v2572 = vadd.f32 %v2509, %v2513
        %v2573 = vadd.f32 %v2572, %v2519
        %v2574 = vadd.f32 %v2573, %v2523
        %v2575 = vadd.f32 %v2574, %v2529
        %v2576 = vadd.f32 %v2575, %v2533
        %v2577 = vsel %vm2550, %v2539, 0.0
        %v2578 = vadd.f32 %v2576, %v2577
        %v2579 = vrot.slane %v2578, 4
        %v2580 = vadd.f32 %v2578, %v2579
        %v2581 = vrot.slane %v2580, 2
        %v2582 = vadd.f32 %v2580, %v2581
        %v2583 = vrot.slane %v2582, 1
        %v2584 = vadd.f32 %v2582, %v2583
        %v2585 = vadd.f32 %v2511, %v2515
        %v2586 = vadd.f32 %v2585, %v2521
        %v2587 = vadd.f32 %v2586, %v2525
        %v2588 = vadd.f32 %v2587, %v2531
        %v2589 = vadd.f32 %v2588, %v2535
        %v2590 = vsel %vm2550, %v2541, 0.0
        %v2591 = vadd.f32 %v2589, %v2590
        %v2592 = vrot.slane %v2591, 4
        %v2593 = vadd.f32 %v2591, %v2592
        %v2594 = vrot.slane %v2593, 2
        %v2595 = vadd.f32 %v2593, %v2594
        %v2596 = vrot.slane %v2595, 1
        %v2597 = vadd.f32 %v2595, %v2596
        %v2598 = vmul.f32 %v2558, 0.020408163
        %v2599 = vmul.f32 %v2571, 0.020408163
        %v2600 = vmul.f32 %v2584, 0.020408163
        %v2601 = vmul.f32 %v2597, 0.020408163
        %v2602 = vsub.f32 %v2225, %v2598
        %v2603 = vsub.f32 %v2227, %v2599
        %v2604 = vsub.f32 %v2509, %v2600
        %v2605 = vsub.f32 %v2511, %v2601
        %v2606 = vsub.f32 %v2229, %v2598
        %v2607 = vsub.f32 %v2231, %v2599
        %v2608 = vsub.f32 %v2513, %v2600
        %v2609 = vsub.f32 %v2515, %v2601
        %v2610 = vsub.f32 %v2235, %v2598
        %v2611 = vsub.f32 %v2237, %v2599
        %v2612 = vsub.f32 %v2519, %v2600
        %v2613 = vsub.f32 %v2521, %v2601
        %v2614 = vsub.f32 %v2239, %v2598
        %v2615 = vsub.f32 %v2241, %v2599
        %v2616 = vsub.f32 %v2523, %v2600
        %v2617 = vsub.f32 %v2525, %v2601
        %v2618 = vsub.f32 %v2245, %v2598
        %v2619 = vsub.f32 %v2247, %v2599
        %v2620 = vsub.f32 %v2529, %v2600
        %v2621 = vsub.f32 %v2531, %v2601
        %v2622 = vsub.f32 %v2249, %v2598
        %v2623 = vsub.f32 %v2251, %v2599
        %v2624 = vsub.f32 %v2533, %v2600
        %v2625 = vsub.f32 %v2535, %v2601
        %v2626 = vsub.f32 %v2255, %v2598
        %v2627 = vsub.f32 %v2257, %v2599
        %v2628 = vsub.f32 %v2539, %v2600
        %v2629 = vsub.f32 %v2541, %v2601
        %v2630 = vmul.f32 %v2602, %v2602
        %v2631 = vmul.f32 %v2603, %v2603
        %v2632 = vmul.f32 %v2604, %v2604
        %v2633 = vmul.f32 %v2605, %v2605
        %v2634 = vmul.f32 %v2606, %v2606
        %v2635 = vmul.f32 %v2607, %v2607
        %v2636 = vmul.f32 %v2608, %v2608
        %v2637 = vmul.f32 %v2609, %v2609
        %v2638 = vmul.f32 %v2610, %v2610
        %v2639 = vmul.f32 %v2611, %v2611
        %v2640 = vmul.f32 %v2612, %v2612
        %v2641 = vmul.f32 %v2613, %v2613
        %v2642 = vmul.f32 %v2614, %v2614
        %v2643 = vmul.f32 %v2615, %v2615
        %v2644 = vmul.f32 %v2616, %v2616
        %v2645 = vmul.f32 %v2617, %v2617
        %v2646 = vmul.f32 %v2618, %v2618
        %v2647 = vmul.f32 %v2619, %v2619
        %v2648 = vmul.f32 %v2620, %v2620
        %v2649 = vmul.f32 %v2621, %v2621
        %v2650 = vmul.f32 %v2622, %v2622
        %v2651 = vmul.f32 %v2623, %v2623
        %v2652 = vmul.f32 %v2624, %v2624
        %v2653 = vmul.f32 %v2625, %v2625
        %v2654 = vmul.f32 %v2626, %v2626
        %v2655 = vmul.f32 %v2627, %v2627
        %v2656 = vmul.f32 %v2628, %v2628
        %v2657 = vmul.f32 %v2629, %v2629
        %v2658 = vadd.f32 %v2630, %v2634
        %v2659 = vadd.f32 %v2658, %v2638
        %v2660 = vadd.f32 %v2659, %v2642
        %v2661 = vadd.f32 %v2660, %v2646
        %v2662 = vadd.f32 %v2661, %v2650
        %v2663 = vsel %vm2550, %v2654, 0.0
        %v2664 = vadd.f32 %v2662, %v2663
        %v2665 = vrot.slane %v2664, 4
        %v2666 = vadd.f32 %v2664, %v2665
        %v2667 = vrot.slane %v2666, 2
        %v2668 = vadd.f32 %v2666, %v2667
        %v2669 = vrot.slane %v2668, 1
        %v2670 = vadd.f32 %v2668, %v2669
        %v2671 = vadd.f32 %v2631, %v2635
        %v2672 = vadd.f32 %v2671, %v2639
        %v2673 = vadd.f32 %v2672, %v2643
        %v2674 = vadd.f32 %v2673, %v2647
        %v2675 = vadd.f32 %v2674, %v2651
        %v2676 = vsel %vm2550, %v2655, 0.0
        %v2677 = vadd.f32 %v2675, %v2676
        %v2678 = vrot.slane %v2677, 4
        %v2679 = vadd.f32 %v2677, %v2678
        %v2680 = vrot.slane %v2679, 2
        %v2681 = vadd.f32 %v2679, %v2680
        %v2682 = vrot.slane %v2681, 1
        %v2683 = vadd.f32 %v2681, %v2682
        %v2684 = vadd.f32 %v2632, %v2636
        %v2685 = vadd.f32 %v2684, %v2640
        %v2686 = vadd.f32 %v2685, %v2644
        %v2687 = vadd.f32 %v2686, %v2648
        %v2688 = vadd.f32 %v2687, %v2652
        %v2689 = vsel %vm2550, %v2656, 0.0
        %v2690 = vadd.f32 %v2688, %v2689
        %v2691 = vrot.slane %v2690, 4
        %v2692 = vadd.f32 %v2690, %v2691
        %v2693 = vrot.slane %v2692, 2
        %v2694 = vadd.f32 %v2692, %v2693
        %v2695 = vrot.slane %v2694, 1
        %v2696 = vadd.f32 %v2694, %v2695
        %v2697 = vadd.f32 %v2633, %v2637
        %v2698 = vadd.f32 %v2697, %v2641
        %v2699 = vadd.f32 %v2698, %v2645
        %v2700 = vadd.f32 %v2699, %v2649
        %v2701 = vadd.f32 %v2700, %v2653
        %v2702 = vsel %vm2550, %v2657, 0.0
        %v2703 = vadd.f32 %v2701, %v2702
        %v2704 = vrot.slane %v2703, 4
        %v2705 = vadd.f32 %v2703, %v2704
        %v2706 = vrot.slane %v2705, 2
        %v2707 = vadd.f32 %v2705, %v2706
        %v2708 = vrot.slane %v2707, 1
        %v2709 = vadd.f32 %v2707, %v2708
        %v2710 = vmul.f32 %v2670, 0.020408163
        %v2711 = vmul.f32 %v2683, 0.020408163
        %v2712 = vmul.f32 %v2696, 0.020408163
        %v2713 = vmul.f32 %v2709, 0.020408163
        %v2714 = vadd.f32 %v2710, 1e-05
        %v2715 = vadd.f32 %v2711, 1e-05
        %v2716 = vadd.f32 %v2712, 1e-05
        %v2717 = vadd.f32 %v2713, 1e-05
        %v2718 = vrsqrt.pop %v2714
        %v2719 = vrsqrt.pop %v2715
        %v2720 = vrsqrt.pop %v2716
        %v2721 = vrsqrt.pop %v2717
        %v2722 = vld [vmem:[%s228] sm:$0xf]
        %v2724 = vlaneseq
        %v2725 = vshrl.u32 %v2724, 7
        %v2726 = vsub.s32 0, %v2725
        %v2727 = vrot.slane %v2722, %v2726
        %v2728 = vlaneseq
        %v2729 = vshrl.u32 %v2728, 7
        %v2730 = vsub.s32 1, %v2729
        %v2731 = vrot.slane %v2722, %v2730
        %v2732 = vlaneseq
        %v2733 = vshrl.u32 %v2732, 7
        %v2734 = vsub.s32 2, %v2733
        %v2735 = vrot.slane %v2722, %v2734
        %v2736 = vlaneseq
        %v2737 = vshrl.u32 %v2736, 7
        %v2738 = vsub.s32 3, %v2737
        %v2739 = vrot.slane %v2722, %v2738
        %v2744 = vmul.f32 %v2718, %v2727
        %v2745 = vmul.f32 %v2719, %v2731
        %v2746 = vmul.f32 %v2720, %v2735
        %v2747 = vmul.f32 %v2721, %v2739
        %v2748 = vlaneseq
        %v2749 = vshrl.u32 %v2748, 7
        %v2750 = vsub.s32 0, %v2749
        %v2751 = vrot.slane %v2744, %v2750
        %v2752 = vlaneseq
        %v2753 = vshrl.u32 %v2752, 7
        %v2754 = vsub.s32 0, %v2753
        %v2755 = vrot.slane %v2745, %v2754
        %v2756 = vlaneseq
        %v2757 = vshrl.u32 %v2756, 7
        %v2758 = vsub.s32 0, %v2757
        %v2759 = vrot.slane %v2746, %v2758
        %v2760 = vlaneseq
        %v2761 = vshrl.u32 %v2760, 7
        %v2762 = vsub.s32 0, %v2761
        %v2763 = vrot.slane %v2747, %v2762
        %v2764 = vmul.f32 %v2602, %v2751
        %v2765 = vmul.f32 %v2603, %v2755
        %v2766 = vmul.f32 %v2604, %v2759
        %v2767 = vmul.f32 %v2605, %v2763
        %v2768 = vmul.f32 %v2606, %v2751
        %v2769 = vmul.f32 %v2607, %v2755
        %v2770 = vmul.f32 %v2608, %v2759
        %v2771 = vmul.f32 %v2609, %v2763
        %v2772 = vmul.f32 %v2610, %v2751
        %v2773 = vmul.f32 %v2611, %v2755
        %v2774 = vmul.f32 %v2612, %v2759
        %v2775 = vmul.f32 %v2613, %v2763
        %v2776 = vmul.f32 %v2614, %v2751
        %v2777 = vmul.f32 %v2615, %v2755
        %v2778 = vmul.f32 %v2616, %v2759
        %v2779 = vmul.f32 %v2617, %v2763
        %v2780 = vmul.f32 %v2618, %v2751
        %v2781 = vmul.f32 %v2619, %v2755
        %v2782 = vmul.f32 %v2620, %v2759
        %v2783 = vmul.f32 %v2621, %v2763
        %v2784 = vmul.f32 %v2622, %v2751
        %v2785 = vmul.f32 %v2623, %v2755
        %v2786 = vmul.f32 %v2624, %v2759
        %v2787 = vmul.f32 %v2625, %v2763
        %v2788 = vmul.f32 %v2626, %v2751
        %v2789 = vmul.f32 %v2627, %v2755
        %v2790 = vmul.f32 %v2628, %v2759
        %v2791 = vmul.f32 %v2629, %v2763
        %v2792 = vld [vmem:[%s233] sm:$0xf]
        %v2794 = vlaneseq
        %v2795 = vshrl.u32 %v2794, 7
        %v2796 = vsub.s32 0, %v2795
        %v2797 = vrot.slane %v2792, %v2796
        %v2798 = vlaneseq
        %v2799 = vshrl.u32 %v2798, 7
        %v2800 = vsub.s32 1, %v2799
        %v2801 = vrot.slane %v2792, %v2800
        %v2802 = vlaneseq
        %v2803 = vshrl.u32 %v2802, 7
        %v2804 = vsub.s32 2, %v2803
        %v2805 = vrot.slane %v2792, %v2804
        %v2806 = vlaneseq
        %v2807 = vshrl.u32 %v2806, 7
        %v2808 = vsub.s32 3, %v2807
        %v2809 = vrot.slane %v2792, %v2808
        %v2814 = vadd.f32 %v2764, %v2797
        %v2815 = vadd.f32 %v2765, %v2801
        %v2816 = vadd.f32 %v2766, %v2805
        %v2817 = vadd.f32 %v2767, %v2809
        %v2818 = vadd.f32 %v2768, %v2797
        %v2819 = vadd.f32 %v2769, %v2801
        %v2820 = vadd.f32 %v2770, %v2805
        %v2821 = vadd.f32 %v2771, %v2809
        %v2822 = vadd.f32 %v2772, %v2797
        %v2823 = vadd.f32 %v2773, %v2801
        %v2824 = vadd.f32 %v2774, %v2805
        %v2825 = vadd.f32 %v2775, %v2809
        %v2826 = vadd.f32 %v2776, %v2797
        %v2827 = vadd.f32 %v2777, %v2801
        %v2828 = vadd.f32 %v2778, %v2805
        %v2829 = vadd.f32 %v2779, %v2809
        %v2830 = vadd.f32 %v2780, %v2797
        %v2831 = vadd.f32 %v2781, %v2801
        %v2832 = vadd.f32 %v2782, %v2805
        %v2833 = vadd.f32 %v2783, %v2809
        %v2834 = vadd.f32 %v2784, %v2797
        %v2835 = vadd.f32 %v2785, %v2801
        %v2836 = vadd.f32 %v2786, %v2805
        %v2837 = vadd.f32 %v2787, %v2809
        %v2838 = vadd.f32 %v2788, %v2797
        %v2839 = vadd.f32 %v2789, %v2801
        %v2840 = vadd.f32 %v2790, %v2805
        %v2841 = vadd.f32 %v2791, %v2809
        %2842 = vst [vmem:[%s217] sm:$0xff] %v2814
        %2843 = vst [vmem:[%s217 + $0x8] sm:$0xff] %v2815
        %2844 = vst [vmem:[%s217 + $0x10] sm:$0xff] %v2816
        %2845 = vst [vmem:[%s217 + $0x18] sm:$0xff] %v2817
        %2846 = vst [vmem:[%s217 + $0x20] sm:$0xff] %v2818
        %2847 = vst [vmem:[%s217 + $0x28] sm:$0xff] %v2819
        %2848 = vst [vmem:[%s217 + $0x30] sm:$0xff] %v2820
        %2849 = vst [vmem:[%s217 + $0x38] sm:$0xff] %v2821
        %2850 = vst [vmem:[%s217 + $0x40] sm:$0xff] %v2822
        %2851 = vst [vmem:[%s217 + $0x48] sm:$0xff] %v2823
        %2852 = vst [vmem:[%s217 + $0x50] sm:$0xff] %v2824
        %2853 = vst [vmem:[%s217 + $0x58] sm:$0xff] %v2825
        %2854 = vst [vmem:[%s217 + $0x60] sm:$0xff] %v2826
        %2855 = vst [vmem:[%s217 + $0x68] sm:$0xff] %v2827
        %2856 = vst [vmem:[%s217 + $0x70] sm:$0xff] %v2828
        %2857 = vst [vmem:[%s217 + $0x78] sm:$0xff] %v2829
        %2858 = vst [vmem:[%s217 + $0x80] sm:$0xff] %v2830
        %2859 = vst [vmem:[%s217 + $0x88] sm:$0xff] %v2831
        %2860 = vst [vmem:[%s217 + $0x90] sm:$0xff] %v2832
        %2861 = vst [vmem:[%s217 + $0x98] sm:$0xff] %v2833
        %2862 = vst [vmem:[%s217 + $0xa0] sm:$0xff] %v2834
        %2863 = vst [vmem:[%s217 + $0xa8] sm:$0xff] %v2835
        %2864 = vst [vmem:[%s217 + $0xb0] sm:$0xff] %v2836
        %2865 = vst [vmem:[%s217 + $0xb8] sm:$0xff] %v2837
        %2866 = vst [vmem:[%s217 + $0xc0] sm:$0x1] %v2838
        %2867 = vst [vmem:[%s217 + $0xc8] sm:$0x1] %v2839
        %2868 = vst [vmem:[%s217 + $0xd0] sm:$0x1] %v2840
        %2869 = vst [vmem:[%s217 + $0xd8] sm:$0x1] %v2841
        %s2870 = sand.u32 %s122, 1
        %s2871 = sand.u32 %s122, 1
        %s2872 = smul.addr %s2871, 224
        %s2873 = scalar_lea.vmem [#allocation2], %s2872
        // Predicated region
        $region37: #{fused_relu_conv1x1_bn.1} parent=35 // pred_check
          %p2874 = pneg %p132
        $region38: #{fused_relu_conv1x1_bn.1} parent=35 // pred_check_branch
          %2876 = sbr.rel (%p2874) target = $region40
        $region39: #{fused_relu_conv1x1_bn.1} parent=35 // pred_region
          %s2877 = smul.u32 4, %s15
          %s2878 = smul.addr %s2877, 8
          %s2879 = scalar_lea.vmem %s4, %s2878
          // Predicated region
          $region41: #{fused_relu_conv1x1_bn.1} parent=39 // pred_check
            _
          $region42: #{fused_relu_conv1x1_bn.1} parent=39 // pred_check_branch
            %2881 = sbr.rel (0) target = $region44
          $region43: #{fused_relu_conv1x1_bn.1} parent=39 // pred_region
            // Predicated region
            $region45: #{fused_relu_conv1x1_bn.1} parent=43 // pred_check
              _
            $region46: #{fused_relu_conv1x1_bn.1} parent=43 // pred_check_branch
              %2883 = sbr.rel (0) target = $region48
            $region47: #{fused_relu_conv1x1_bn.1} parent=43 // pred_region
              loop: start=0, step=1, limit=1
              $region49: #{fused_relu_conv1x1_bn.1} parent=47 // loop_pre_header
                _
              $region50: #{fused_relu_conv1x1_bn.1} parent=47 // loop_header
                %s2885 = sphi 0, %s2889
                %p2886 = scmp.ge.s32.totalorder %s2885, 1
                %s2890 = sphi %s2873, %s2873
                %s2891 = sphi %s2879, %s2879
              $region51: #{fused_relu_conv1x1_bn.1} parent=47 // loop_header_branch
                %2888 = sbr.rel (%p2886) target = $region55
              $region52: #{fused_relu_conv1x1_bn.1} parent=47 // loop_body
                %v2892 = vld [vmem:[%s2890] sm:$0xff]
                %2893 = vst [vmem:[%s2891] sm:$0xff] %v2892
                %v2894 = vld [vmem:[%s2890 + $0x8] sm:$0xff]
                %2895 = vst [vmem:[%s2891 + $0x8] sm:$0xff] %v2894
                %v2896 = vld [vmem:[%s2890 + $0x10] sm:$0xff]
                %2897 = vst [vmem:[%s2891 + $0x10] sm:$0xff] %v2896
                %v2898 = vld [vmem:[%s2890 + $0x18] sm:$0xff]
                %2899 = vst [vmem:[%s2891 + $0x18] sm:$0xff] %v2898
                %v2900 = vld [vmem:[%s2890 + $0x20] sm:$0xff]
                %2901 = vst [vmem:[%s2891 + $0x40] sm:$0xff] %v2900
                %v2902 = vld [vmem:[%s2890 + $0x28] sm:$0xff]
                %2903 = vst [vmem:[%s2891 + $0x48] sm:$0xff] %v2902
                %v2904 = vld [vmem:[%s2890 + $0x30] sm:$0xff]
                %2905 = vst [vmem:[%s2891 + $0x50] sm:$0xff] %v2904
                %v2906 = vld [vmem:[%s2890 + $0x38] sm:$0xff]
                %2907 = vst [vmem:[%s2891 + $0x58] sm:$0xff] %v2906
                %v2908 = vld [vmem:[%s2890 + $0x40] sm:$0xff]
                %2909 = vst [vmem:[%s2891 + $0x80] sm:$0xff] %v2908
                %v2910 = vld [vmem:[%s2890 + $0x48] sm:$0xff]
                %2911 = vst [vmem:[%s2891 + $0x88] sm:$0xff] %v2910
                %v2912 = vld [vmem:[%s2890 + $0x50] sm:$0xff]
                %2913 = vst [vmem:[%s2891 + $0x90] sm:$0xff] %v2912
                %v2914 = vld [vmem:[%s2890 + $0x58] sm:$0xff]
                %2915 = vst [vmem:[%s2891 + $0x98] sm:$0xff] %v2914
                %v2916 = vld [vmem:[%s2890 + $0x60] sm:$0xff]
                %2917 = vst [vmem:[%s2891 + $0xc0] sm:$0xff] %v2916
                %v2918 = vld [vmem:[%s2890 + $0x68] sm:$0xff]
                %2919 = vst [vmem:[%s2891 + $0xc8] sm:$0xff] %v2918
                %v2920 = vld [vmem:[%s2890 + $0x70] sm:$0xff]
                %2921 = vst [vmem:[%s2891 + $0xd0] sm:$0xff] %v2920
                %v2922 = vld [vmem:[%s2890 + $0x78] sm:$0xff]
                %2923 = vst [vmem:[%s2891 + $0xd8] sm:$0xff] %v2922
                %v2924 = vld [vmem:[%s2890 + $0x80] sm:$0xff]
                %2925 = vst [vmem:[%s2891 + $0x100] sm:$0xff] %v2924
                %v2926 = vld [vmem:[%s2890 + $0x88] sm:$0xff]
                %2927 = vst [vmem:[%s2891 + $0x108] sm:$0xff] %v2926
                %v2928 = vld [vmem:[%s2890 + $0x90] sm:$0xff]
                %2929 = vst [vmem:[%s2891 + $0x110] sm:$0xff] %v2928
                %v2930 = vld [vmem:[%s2890 + $0x98] sm:$0xff]
                %2931 = vst [vmem:[%s2891 + $0x118] sm:$0xff] %v2930
                %v2932 = vld [vmem:[%s2890 + $0xa0] sm:$0xff]
                %2933 = vst [vmem:[%s2891 + $0x140] sm:$0xff] %v2932
                %v2934 = vld [vmem:[%s2890 + $0xa8] sm:$0xff]
                %2935 = vst [vmem:[%s2891 + $0x148] sm:$0xff] %v2934
                %v2936 = vld [vmem:[%s2890 + $0xb0] sm:$0xff]
                %2937 = vst [vmem:[%s2891 + $0x150] sm:$0xff] %v2936
                %v2938 = vld [vmem:[%s2890 + $0xb8] sm:$0xff]
                %2939 = vst [vmem:[%s2891 + $0x158] sm:$0xff] %v2938
                %v2940 = vld [vmem:[%s2890 + $0xc0] sm:$0xff]
                %2941 = vst [vmem:[%s2891 + $0x180] sm:$0xff] %v2940
                %v2942 = vld [vmem:[%s2890 + $0xc8] sm:$0xff]
                %2943 = vst [vmem:[%s2891 + $0x188] sm:$0xff] %v2942
                %v2944 = vld [vmem:[%s2890 + $0xd0] sm:$0xff]
                %2945 = vst [vmem:[%s2891 + $0x190] sm:$0xff] %v2944
                %v2946 = vld [vmem:[%s2890 + $0xd8] sm:$0xff]
                %2947 = vst [vmem:[%s2891 + $0x198] sm:$0xff] %v2946
              $region53: #{fused_relu_conv1x1_bn.1} parent=47 // loop_footer
                %s2889 = sadd.s32 1, %s2885
              $region54: #{fused_relu_conv1x1_bn.1} parent=47 // loop_footer_branch
                %2884 = sbr.rel target = $region50
              $region55: #{fused_relu_conv1x1_bn.1} parent=47 // loop_exit
                _
            $region48: #{fused_relu_conv1x1_bn.1} parent=43 // pred_fallthru
              _
            // Predicated region
            $region56: #{fused_relu_conv1x1_bn.1} parent=43 // pred_check
              _
            $region57: #{fused_relu_conv1x1_bn.1} parent=43 // pred_check_branch
              %2949 = sbr.rel target = $region59
            $region58: #{fused_relu_conv1x1_bn.1} parent=43 // pred_region
              _
            $region59: #{fused_relu_conv1x1_bn.1} parent=43 // pred_fallthru
              _
          $region44: #{fused_relu_conv1x1_bn.1} parent=39 // pred_fallthru
            _
          %2950 = vnop
        $region40: #{fused_relu_conv1x1_bn.1} parent=35 // pred_fallthru
          _
      $region36: #{fused_relu_conv1x1_bn.1} parent=5 // pred_fallthru
        _
      %p2951 = scmp.le.s32.totalorder 2, %s10
      // Predicated region
      $region60: #{fused_relu_conv1x1_bn.1} parent=5 // pred_check
        %p2952 = pneg %p2951
      $region61: #{fused_relu_conv1x1_bn.1} parent=5 // pred_check_branch
        %2954 = sbr.rel (%p2952) target = $region63
      $region62: #{fused_relu_conv1x1_bn.1} parent=5 // pred_region
        %s2955 = ssub.s32 %s10, 2
        // Predicated region
        $region64: #{fused_relu_conv1x1_bn.1} parent=62 // pred_check
          %p2956 = pneg %p138
        $region65: #{fused_relu_conv1x1_bn.1} parent=62 // pred_check_branch
          %2958 = sbr.rel (%p2956) target = $region67
        $region66: #{fused_relu_conv1x1_bn.1} parent=62 // pred_region
          %s2959 = sand.u32 %s123, 1
          %s2960 = sand.u32 %s123, 1
          %s2961 = smul.addr %s2960, 224
          %s2962 = scalar_lea.vmem [#allocation2], %s2961
        $region67: #{fused_relu_conv1x1_bn.1} parent=62 // pred_fallthru
          _
      $region63: #{fused_relu_conv1x1_bn.1} parent=5 // pred_fallthru
        _
    $region6: #{fused_relu_conv1x1_bn.1} parent=1 // loop_footer
      %s14 = sadd.s32 1, %s10
    $region7: #{fused_relu_conv1x1_bn.1} parent=1 // loop_footer_branch
      %9 = sbr.rel target = $region3
    $region8: #{fused_relu_conv1x1_bn.1} parent=1 // loop_exit
      _

</llo_original>
